<compile_context>
chip_gen: v6e
topology: v6e:2x2x1
jax: 0.10.0
libtpu: 0.0.40
codegen_flags: <defaults>
</compile_context>

<pallas_src>
import jax
import jax.numpy as jnp
from jax import lax
from jax.experimental import pallas as pl
from jax.experimental.pallas import tpu as pltpu

# ---- problem sizes (BAM(gate_channel=32) on a 16x16 map) -------------------
C = 32            # gate_channel
RED = 16          # reduction_ratio
CR = C // RED     # reduced channels = 2
H = W = 16
B = 2
DIL = 4           # dilation_val
PAD = 4           # replicate padding of the dilated convs (reference only)
EPS = 1e-5        # BatchNorm eps
CW = C * W        # 512  lane-dense stacked width
CRW = CR * W      # 32
BH = B * H        # 32   batch-merged row count (matmul M)
HI = lax.Precision.HIGHEST   # used only in the pure-JAX reference

# rows of the packed `misc` slab (8, CW)
_ROW_W2 = 0            # rows [0:CR]     : fc1 weight, lane-tiled        (CR, CW)
_ROW_B2 = CR           # row  CR         : fc1 bias, lane-tiled          (1, CW)
_ROW_BR = CR + 1       # row  CR+1       : 1x1-reduce bias (lanes 0:CRW)
_ROW_BD = CR + 2       # rows CR+2, CR+3 : dilated-conv biases (lanes 0:CRW)
_ROW_SC = CR + 4       # row  CR+4       : [fc0 bias (0:CR), final-conv bias (CR)]


# ----------------------------- Pallas kernel --------------------------------
def bam_kernel(x_ref, rhs1_ref, pmat_ref, convpk_ref, fw_ref, misc_ref, out_ref):
    x = x_ref[...]                                       # (BH, CW)
    misc = misc_ref[...]                                 # (8, CW)

    # ---- fused [1x1-reduce | pooled fc0] : the only K=CW matmul -------------
    z1 = jnp.dot(x, rhs1_ref[...],
                 preferred_element_type=jnp.float32)     # (BH, CRW + CR)

    # ---- ChannelGate ---------------------------------------------------------
    q = z1[:, CRW:CRW + CR]                              # (BH, CR) partial pooled@fc0^T
    # within-batch row sum + broadcast back (pmat = Bexp @ Bsum), fc0 bias, ReLU
    h = jnp.maximum(
        jnp.dot(pmat_ref[...], q, preferred_element_type=jnp.float32)
        + misc[_ROW_SC:_ROW_SC + 1, 0:CR], 0.0)          # (BH, CR)
    cg = (jnp.dot(h, misc[_ROW_W2:_ROW_W2 + CR, :],
                  preferred_element_type=jnp.float32)
          + misc[_ROW_B2:_ROW_B2 + 1, :])                # (BH, CW)

    # ---- SpatialGate ---------------------------------------------------------
    y = jnp.maximum(z1[:, 0:CRW] + misc[_ROW_BR:_ROW_BR + 1, 0:CRW], 0.0)  # (BH, CRW)

    scat = convpk_ref[0]                                 # (BH, 3*BH) row-shift selectors
    for li in range(2):                                  # two dilated 3x3 layers
        gcat = convpk_ref[1 + li]                        # (CRW, 3*CRW)
        t = jnp.dot(y, gcat, preferred_element_type=jnp.float32)          # (BH, 3*CRW)
        tstack = jnp.concatenate(
            [t[:, kh * CRW:(kh + 1) * CRW] for kh in range(3)], axis=0)   # (3*BH, CRW)
        y = jnp.maximum(
            jnp.dot(scat, tstack, preferred_element_type=jnp.float32)
            + misc[_ROW_BD + li:_ROW_BD + li + 1, 0:CRW], 0.0)            # (BH, CRW)

    sg = (jnp.dot(y, fw_ref[...], preferred_element_type=jnp.float32)
          + misc[_ROW_SC:_ROW_SC + 1, CR:CR + 1])        # (BH, CW)

    # ---- combine: out = (1 + sigmoid(cg * sg)) * x ---------------------------
    att = 1.5 + 0.5 * jnp.tanh(0.5 * (cg * sg))          # 1 + sigmoid, via one EUP op
    out_ref[...] = att * x


def _full_spec(arr):
    """Whole-array VMEM block (block shape == full array dims)."""
    nd = arr.ndim
    return pl.BlockSpec(arr.shape, lambda i, _n=nd: (0,) * _n)


def bam_pallas(x, *kp):
    # layout plumbing: NCHW -> lane-dense, batch-merged slab (B*H, C*W)
    x_m = jnp.transpose(x, (0, 2, 1, 3)).reshape(BH, CW)
    out_m = pl.pallas_call(
        bam_kernel,
        out_shape=jax.ShapeDtypeStruct((BH, CW), jnp.float32),
        grid_spec=pltpu.PrefetchScalarGridSpec(
            num_scalar_prefetch=0,
            grid=(1,),
            in_specs=[_full_spec(x_m)] + [_full_spec(a) for a in kp],
            out_specs=pl.BlockSpec((BH, CW), lambda i: (0, 0)),
        ),
        compiler_params=pltpu.CompilerParams(
            dimension_semantics=("arbitrary",)),
    )(x_m, *kp)
    return jnp.transpose(out_m.reshape(B, H, C, W), (0, 2, 1, 3))


bam_pallas_jit = jax.jit(bam_pallas)


# --------------------- parameter init, BN folding, packing -------------------
def init_params(key):
    ks = iter(jax.random.split(key, 32))

    def nx(shape, s=0.2):
        return s * jax.random.normal(next(ks), shape, dtype=jnp.float32)

    p = {}
    # ChannelGate: Linear(C, CR), BN1d(CR), ReLU, Linear(CR, C)
    p['fc0_w'] = nx((CR, C)); p['fc0_b'] = nx((CR,), 0.1)
    p['bn1_g'] = 1.0 + nx((CR,), 0.1); p['bn1_b'] = nx((CR,), 0.1)
    p['bn1_m'] = nx((CR,), 0.1);       p['bn1_v'] = 0.6 + jnp.abs(nx((CR,), 0.2))
    p['fc1_w'] = nx((C, CR)); p['fc1_b'] = nx((C,), 0.1)
    # SpatialGate: Conv1x1(C->CR)+BN, 2x [dilated Conv3x3(CR->CR)+BN], Conv1x1(CR->1)
    p['red_w'] = nx((CR, C, 1, 1)); p['red_b'] = nx((CR,), 0.1)
    p['bnr_g'] = 1.0 + nx((CR,), 0.1); p['bnr_b'] = nx((CR,), 0.1)
    p['bnr_m'] = nx((CR,), 0.1);       p['bnr_v'] = 0.6 + jnp.abs(nx((CR,), 0.2))
    for i in range(2):
        p[f'di{i}_w'] = nx((CR, CR, 3, 3)); p[f'di{i}_b'] = nx((CR,), 0.1)
        p[f'bnd{i}_g'] = 1.0 + nx((CR,), 0.1); p[f'bnd{i}_b'] = nx((CR,), 0.1)
        p[f'bnd{i}_m'] = nx((CR,), 0.1);       p[f'bnd{i}_v'] = 0.6 + jnp.abs(nx((CR,), 0.2))
    p['fin_w'] = nx((1, CR, 1, 1)); p['fin_b'] = nx((1,), 0.1)
    return p


def _fold_bn(w, b, g, beta, m, v):
    """Fold inference-mode BN into the preceding linear/conv (per out-channel)."""
    s = g / jnp.sqrt(v + EPS)
    bcast = (slice(None),) + (None,) * (w.ndim - 1)
    return w * s[bcast], (b - m) * s + beta


def _shift_matrix(n, shift):
    """S[a, b] = 1 iff b == clamp(a + shift, 0, n-1)  (replicate-pad selector)."""
    idx = jnp.clip(jnp.arange(n) + shift, 0, n - 1)
    return jnp.eye(n, dtype=jnp.float32)[idx]


def kernel_params(p):
    f32 = jnp.float32
    w1f, b1f = _fold_bn(p['fc0_w'], p['fc0_b'], p['bn1_g'], p['bn1_b'],
                        p['bn1_m'], p['bn1_v'])
    wr4, brf = _fold_bn(p['red_w'], p['red_b'], p['bnr_g'], p['bnr_b'],
                        p['bnr_m'], p['bnr_v'])
    wd1, bd1 = _fold_bn(p['di0_w'], p['di0_b'], p['bnd0_g'], p['bnd0_b'],
                        p['bnd0_m'], p['bnd0_v'])
    wd2, bd2 = _fold_bn(p['di1_w'], p['di1_b'], p['bnd1_g'], p['bnd1_b'],
                        p['bnd1_m'], p['bnd1_v'])
    wrf = wr4[:, :, 0, 0]                       # (CR, C)
    wf = p['fin_w'][0, :, 0, 0]                 # (CR,)

    eye_w = jnp.eye(W, dtype=f32)
    ones_col = jnp.ones((W, 1), f32)
    ones_row = jnp.ones((1, W), f32)

    # fused first RHS: [ 1x1 reduce (BN folded) | avg-pool @ fc0_w^T (BN folded) ]
    pool_mat = jnp.kron(jnp.eye(C, dtype=f32), ones_col) / float(H * W)   # (CW, C)
    poolw1 = pool_mat @ w1f.T                                             # (CW, CR)
    rr_k = jnp.kron(wrf.T, eye_w)                                         # (CW, CRW)
    rhs1 = jnp.concatenate([rr_k, poolw1], axis=1)                        # (CW, CRW+CR)

    # within-batch sum + broadcast selector (Bexp @ Bsum)
    pmat = jnp.kron(jnp.eye(B, dtype=f32), jnp.ones((H, H), f32))         # (BH, BH)

    # row-shift selectors (replicate padding via clamped one-hots), batch-blocked
    scat = jnp.concatenate(
        [jnp.kron(jnp.eye(B, dtype=f32), _shift_matrix(H, (kh - 1) * DIL))
         for kh in range(3)], axis=1)                                     # (BH, 3*BH)

    def conv_gcat(wd):                          # wd: (CR, CR, 3, 3), BN folded
        mats = []
        for kh in range(3):
            g = jnp.zeros((CRW, CRW), f32)
            for kw in range(3):
                scol = _shift_matrix(W, (kw - 1) * DIL).T                 # [j', j]
                g = g + jnp.kron(wd[:, :, kh, kw].T, scol)
            mats.append(g)
        return jnp.concatenate(mats, axis=1)                              # (CRW, 3*CRW)

    convpk = jnp.stack([scat, conv_gcat(wd1), conv_gcat(wd2)])            # (3, 32, 96)

    # final 1x1 (CR -> 1), broadcast across all C output channel blocks
    fw_k = jnp.kron(wf.reshape(CR, 1) * jnp.ones((1, C), f32), eye_w)     # (CRW, CW)

    # misc slab: fc1 weight rows, all bias rows, scalars — one DMA
    w2_k = jnp.kron(p['fc1_w'].T, ones_row)                               # (CR, CW)
    b2_k = jnp.kron(p['fc1_b'].reshape(1, C), ones_row)                   # (1, CW)
    br_k = jnp.kron(brf.reshape(1, CR), ones_row)                         # (1, CRW)
    bd1_k = jnp.kron(bd1.reshape(1, CR), ones_row)
    bd2_k = jnp.kron(bd2.reshape(1, CR), ones_row)

    misc = jnp.zeros((8, CW), f32)
    misc = misc.at[_ROW_W2:_ROW_W2 + CR, :].set(w2_k)
    misc = misc.at[_ROW_B2, :].set(b2_k[0])
    misc = misc.at[_ROW_BR, 0:CRW].set(br_k[0])
    misc = misc.at[_ROW_BD + 0, 0:CRW].set(bd1_k[0])
    misc = misc.at[_ROW_BD + 1, 0:CRW].set(bd2_k[0])
    misc = misc.at[_ROW_SC, 0:CR].set(b1f)
    misc = misc.at[_ROW_SC, CR].set(p['fin_b'][0])

    return (rhs1, pmat, convpk, fw_k, misc)


# ------------------------------- reference -----------------------------------
def bam_reference(x, p):
    """Pure-JAX reference (XLA convs, high precision) mirroring the PyTorch
    module in BatchNorm eval mode."""
    # ChannelGate
    pooled = jnp.mean(x, axis=(2, 3))                                     # (B, C)
    z = jnp.dot(pooled, p['fc0_w'].T, precision=HI) + p['fc0_b']
    z = (z - p['bn1_m']) / jnp.sqrt(p['bn1_v'] + EPS) * p['bn1_g'] + p['bn1_b']
    z = jnp.maximum(z, 0.0)
    cg = (jnp.dot(z, p['fc1_w'].T, precision=HI) + p['fc1_b'])[:, :, None, None]

    def conv(y, w, b, dil):
        out = lax.conv_general_dilated(
            y, w, window_strides=(1, 1), padding='VALID',
            rhs_dilation=(dil, dil),
            dimension_numbers=('NCHW', 'OIHW', 'NCHW'),
            precision=HI)
        return out + b[None, :, None, None]

    def bn2d(y, g, b, m, v):
        return (y - m[None, :, None, None]) / jnp.sqrt(v + EPS)[None, :, None, None] \
               * g[None, :, None, None] + b[None, :, None, None]

    # SpatialGate
    y = conv(x, p['red_w'], p['red_b'], 1)
    y = jnp.maximum(bn2d(y, p['bnr_g'], p['bnr_b'], p['bnr_m'], p['bnr_v']), 0.0)
    for i in range(2):
        yp = jnp.pad(y, ((0, 0), (0, 0), (PAD, PAD), (PAD, PAD)), mode='edge')
        y = conv(yp, p[f'di{i}_w'], p[f'di{i}_b'], DIL)
        y = jnp.maximum(bn2d(y, p[f'bnd{i}_g'], p[f'bnd{i}_b'],
                             p[f'bnd{i}_m'], p[f'bnd{i}_v']), 0.0)
    sg = conv(y, p['fin_w'], p['fin_b'], 1)                               # (B,1,H,W)

    att = 1.0 + jax.nn.sigmoid(cg * sg)
    return att * x


# --------------------------------- main ---------------------------------------
if __name__ == "__main__":
    key = jax.random.PRNGKey(0)
    kx, kw = jax.random.split(key)
    x = jax.random.normal(kx, (B, C, H, W), dtype=jnp.float32)
    params = init_params(kw)
    kparams = kernel_params(params)

    out = bam_pallas_jit(x, *kparams)
    out = jax.block_until_ready(out)

    ref = bam_reference(x, params)
    max_err = float(jnp.max(jnp.abs(out - ref)))
    assert out.shape == x.shape, f"bad output shape {out.shape}"
    assert max_err < 2e-3, f"mismatch vs JAX reference, max abs err = {max_err}"
    print("KERNEL_OK")
</pallas_src>

<mosaic_0001>
module attributes {stable_mosaic.version = 11 : i64} {
  func.func @bam_kernel(%arg0: i32, %arg1: memref<32x512xf32, #tpu.memory_space<vmem>>, %arg2: memref<512x34xf32, #tpu.memory_space<vmem>>, %arg3: memref<32x32xf32, #tpu.memory_space<vmem>>, %arg4: memref<3x32x96xf32, #tpu.memory_space<vmem>>, %arg5: memref<32x512xf32, #tpu.memory_space<vmem>>, %arg6: memref<8x512xf32, #tpu.memory_space<vmem>>, %arg7: memref<32x512xf32, #tpu.memory_space<vmem>>) attributes {dimension_semantics = [#tpu.dimension_semantics<arbitrary>], iteration_bounds = array<i64: 1>, scalar_prefetch = 0 : i64, scratch_operands = 0 : i64, tpu.core_type = #tpu.core_type<tc>, window_params = [{pipeline_mode = #tpu.pipeline_mode<synchronous>, transform_indices = @transform_0, window_bounds = array<i64: 32, 512>}, {pipeline_mode = #tpu.pipeline_mode<synchronous>, transform_indices = @transform_1, window_bounds = array<i64: 512, 34>}, {pipeline_mode = #tpu.pipeline_mode<synchronous>, transform_indices = @transform_2, window_bounds = array<i64: 32, 32>}, {pipeline_mode = #tpu.pipeline_mode<synchronous>, transform_indices = @transform_3, window_bounds = array<i64: 3, 32, 96>}, {pipeline_mode = #tpu.pipeline_mode<synchronous>, transform_indices = @transform_4, window_bounds = array<i64: 32, 512>}, {pipeline_mode = #tpu.pipeline_mode<synchronous>, transform_indices = @transform_5, window_bounds = array<i64: 8, 512>}, {pipeline_mode = #tpu.pipeline_mode<synchronous>, transform_indices = @transform_6, window_bounds = array<i64: 32, 512>}]} {
    %c0 = arith.constant 0 : index
    %c0_0 = arith.constant 0 : index
    %0 = vector.load %arg1[%c0, %c0_0] : memref<32x512xf32, #tpu.memory_space<vmem>>, vector<32x512xf32>
    %c0_1 = arith.constant 0 : index
    %c0_2 = arith.constant 0 : index
    %1 = vector.load %arg6[%c0_1, %c0_2] : memref<8x512xf32, #tpu.memory_space<vmem>>, vector<8x512xf32>
    %c0_3 = arith.constant 0 : index
    %c0_4 = arith.constant 0 : index
    %2 = vector.load %arg2[%c0_3, %c0_4] : memref<512x34xf32, #tpu.memory_space<vmem>>, vector<512x34xf32>
    %cst = arith.constant dense<0.000000e+00> : vector<32x34xf32>
    %3 = tpu.matmul %0, %2, %cst {dimension_numbers = #tpu.dot_dimension_numbers<[1], [0], [0], [1], [0, 0, 1, 1], [], []>} : vector<32x512xf32>, vector<512x34xf32>, vector<32x34xf32> -> vector<32x34xf32>
    %4 = vector.extract_strided_slice %3 {offsets = [0, 32], sizes = [32, 2], strides = [1, 1]} : vector<32x34xf32> to vector<32x2xf32>
    %c0_5 = arith.constant 0 : index
    %c0_6 = arith.constant 0 : index
    %5 = vector.load %arg3[%c0_5, %c0_6] : memref<32x32xf32, #tpu.memory_space<vmem>>, vector<32x32xf32>
    %cst_7 = arith.constant dense<0.000000e+00> : vector<32x2xf32>
    %6 = tpu.matmul %5, %4, %cst_7 {dimension_numbers = #tpu.dot_dimension_numbers<[1], [0], [0], [1], [0, 0, 1, 1], [], []>} : vector<32x32xf32>, vector<32x2xf32>, vector<32x2xf32> -> vector<32x2xf32>
    %7 = vector.extract_strided_slice %1 {offsets = [6, 0], sizes = [1, 2], strides = [1, 1]} : vector<8x512xf32> to vector<1x2xf32>
    %8 = vector.broadcast %7 : vector<1x2xf32> to vector<32x2xf32>
    %9 = arith.addf %6, %8 : vector<32x2xf32>
    %cst_8 = arith.constant 0.000000e+00 : f32
    %10 = vector.broadcast %cst_8 : f32 to vector<32x2xf32>
    %11 = arith.maximumf %9, %10 : vector<32x2xf32>
    %12 = vector.extract_strided_slice %1 {offsets = [0, 0], sizes = [2, 512], strides = [1, 1]} : vector<8x512xf32> to vector<2x512xf32>
    %cst_9 = arith.constant dense<0.000000e+00> : vector<32x512xf32>
    %13 = tpu.matmul %11, %12, %cst_9 {dimension_numbers = #tpu.dot_dimension_numbers<[1], [0], [0], [1], [0, 0, 1, 1], [], []>} : vector<32x2xf32>, vector<2x512xf32>, vector<32x512xf32> -> vector<32x512xf32>
    %14 = vector.extract_strided_slice %1 {offsets = [2, 0], sizes = [1, 512], strides = [1, 1]} : vector<8x512xf32> to vector<1x512xf32>
    %15 = vector.broadcast %14 : vector<1x512xf32> to vector<32x512xf32>
    %16 = arith.addf %13, %15 : vector<32x512xf32>
    %17 = vector.extract_strided_slice %3 {offsets = [0, 0], sizes = [32, 32], strides = [1, 1]} : vector<32x34xf32> to vector<32x32xf32>
    %18 = vector.extract_strided_slice %1 {offsets = [3, 0], sizes = [1, 32], strides = [1, 1]} : vector<8x512xf32> to vector<1x32xf32>
    %19 = vector.broadcast %18 : vector<1x32xf32> to vector<32x32xf32>
    %20 = arith.addf %17, %19 : vector<32x32xf32>
    %cst_10 = arith.constant 0.000000e+00 : f32
    %21 = vector.broadcast %cst_10 : f32 to vector<32x32xf32>
    %22 = arith.maximumf %20, %21 : vector<32x32xf32>
    %c0_11 = arith.constant 0 : index
    %c0_12 = arith.constant 0 : index
    %c0_13 = arith.constant 0 : index
    %23 = vector.load %arg4[%c0_11, %c0_12, %c0_13] : memref<3x32x96xf32, #tpu.memory_space<vmem>>, vector<1x32x96xf32>
    %24 = vector.shape_cast %23 : vector<1x32x96xf32> to vector<32x96xf32>
    %c1 = arith.constant 1 : index
    %c0_14 = arith.constant 0 : index
    %c0_15 = arith.constant 0 : index
    %25 = vector.load %arg4[%c1, %c0_14, %c0_15] : memref<3x32x96xf32, #tpu.memory_space<vmem>>, vector<1x32x96xf32>
    %26 = vector.shape_cast %25 : vector<1x32x96xf32> to vector<32x96xf32>
    %cst_16 = arith.constant dense<0.000000e+00> : vector<32x96xf32>
    %27 = tpu.matmul %22, %26, %cst_16 {dimension_numbers = #tpu.dot_dimension_numbers<[1], [0], [0], [1], [0, 0, 1, 1], [], []>} : vector<32x32xf32>, vector<32x96xf32>, vector<32x96xf32> -> vector<32x96xf32>
    %28 = vector.extract_strided_slice %27 {offsets = [0, 0], sizes = [32, 32], strides = [1, 1]} : vector<32x96xf32> to vector<32x32xf32>
    %29 = vector.extract_strided_slice %27 {offsets = [0, 32], sizes = [32, 32], strides = [1, 1]} : vector<32x96xf32> to vector<32x32xf32>
    %30 = vector.extract_strided_slice %27 {offsets = [0, 64], sizes = [32, 32], strides = [1, 1]} : vector<32x96xf32> to vector<32x32xf32>
    %31 = tpu.concatenate %28, %29, %30 in 0 : vector<32x32xf32>, vector<32x32xf32>, vector<32x32xf32> -> vector<96x32xf32>
    %cst_17 = arith.constant dense<0.000000e+00> : vector<32x32xf32>
    %32 = tpu.matmul %24, %31, %cst_17 {dimension_numbers = #tpu.dot_dimension_numbers<[1], [0], [0], [1], [0, 0, 1, 1], [], []>} : vector<32x96xf32>, vector<96x32xf32>, vector<32x32xf32> -> vector<32x32xf32>
    %33 = vector.extract_strided_slice %1 {offsets = [4, 0], sizes = [1, 32], strides = [1, 1]} : vector<8x512xf32> to vector<1x32xf32>
    %34 = vector.broadcast %33 : vector<1x32xf32> to vector<32x32xf32>
    %35 = arith.addf %32, %34 : vector<32x32xf32>
    %cst_18 = arith.constant 0.000000e+00 : f32
    %36 = vector.broadcast %cst_18 : f32 to vector<32x32xf32>
    %37 = arith.maximumf %35, %36 : vector<32x32xf32>
    %c2 = arith.constant 2 : index
    %c0_19 = arith.constant 0 : index
    %c0_20 = arith.constant 0 : index
    %38 = vector.load %arg4[%c2, %c0_19, %c0_20] : memref<3x32x96xf32, #tpu.memory_space<vmem>>, vector<1x32x96xf32>
    %39 = vector.shape_cast %38 : vector<1x32x96xf32> to vector<32x96xf32>
    %cst_21 = arith.constant dense<0.000000e+00> : vector<32x96xf32>
    %40 = tpu.matmul %37, %39, %cst_21 {dimension_numbers = #tpu.dot_dimension_numbers<[1], [0], [0], [1], [0, 0, 1, 1], [], []>} : vector<32x32xf32>, vector<32x96xf32>, vector<32x96xf32> -> vector<32x96xf32>
    %41 = vector.extract_strided_slice %40 {offsets = [0, 0], sizes = [32, 32], strides = [1, 1]} : vector<32x96xf32> to vector<32x32xf32>
    %42 = vector.extract_strided_slice %40 {offsets = [0, 32], sizes = [32, 32], strides = [1, 1]} : vector<32x96xf32> to vector<32x32xf32>
    %43 = vector.extract_strided_slice %40 {offsets = [0, 64], sizes = [32, 32], strides = [1, 1]} : vector<32x96xf32> to vector<32x32xf32>
    %44 = tpu.concatenate %41, %42, %43 in 0 : vector<32x32xf32>, vector<32x32xf32>, vector<32x32xf32> -> vector<96x32xf32>
    %cst_22 = arith.constant dense<0.000000e+00> : vector<32x32xf32>
    %45 = tpu.matmul %24, %44, %cst_22 {dimension_numbers = #tpu.dot_dimension_numbers<[1], [0], [0], [1], [0, 0, 1, 1], [], []>} : vector<32x96xf32>, vector<96x32xf32>, vector<32x32xf32> -> vector<32x32xf32>
    %46 = vector.extract_strided_slice %1 {offsets = [5, 0], sizes = [1, 32], strides = [1, 1]} : vector<8x512xf32> to vector<1x32xf32>
    %47 = vector.broadcast %46 : vector<1x32xf32> to vector<32x32xf32>
    %48 = arith.addf %45, %47 : vector<32x32xf32>
    %cst_23 = arith.constant 0.000000e+00 : f32
    %49 = vector.broadcast %cst_23 : f32 to vector<32x32xf32>
    %50 = arith.maximumf %48, %49 : vector<32x32xf32>
    %c0_24 = arith.constant 0 : index
    %c0_25 = arith.constant 0 : index
    %51 = vector.load %arg5[%c0_24, %c0_25] : memref<32x512xf32, #tpu.memory_space<vmem>>, vector<32x512xf32>
    %cst_26 = arith.constant dense<0.000000e+00> : vector<32x512xf32>
    %52 = tpu.matmul %50, %51, %cst_26 {dimension_numbers = #tpu.dot_dimension_numbers<[1], [0], [0], [1], [0, 0, 1, 1], [], []>} : vector<32x32xf32>, vector<32x512xf32>, vector<32x512xf32> -> vector<32x512xf32>
    %53 = vector.extract_strided_slice %1 {offsets = [6, 2], sizes = [1, 1], strides = [1, 1]} : vector<8x512xf32> to vector<1x1xf32>
    %54 = vector.broadcast %53 : vector<1x1xf32> to vector<32x512xf32>
    %55 = arith.addf %52, %54 : vector<32x512xf32>
    %56 = arith.mulf %16, %55 : vector<32x512xf32>
    %cst_27 = arith.constant 5.000000e-01 : f32
    %57 = vector.broadcast %cst_27 : f32 to vector<32x512xf32>
    %58 = arith.mulf %57, %56 : vector<32x512xf32>
    %59 = math.tanh %58 : vector<32x512xf32>
    %cst_28 = arith.constant 5.000000e-01 : f32
    %60 = vector.broadcast %cst_28 : f32 to vector<32x512xf32>
    %61 = arith.mulf %60, %59 : vector<32x512xf32>
    %cst_29 = arith.constant 1.500000e+00 : f32
    %62 = vector.broadcast %cst_29 : f32 to vector<32x512xf32>
    %63 = arith.addf %62, %61 : vector<32x512xf32>
    %64 = arith.mulf %63, %0 : vector<32x512xf32>
    %c0_30 = arith.constant 0 : index
    %c0_31 = arith.constant 0 : index
    %65 = vector.load %arg7[%c0_30, %c0_31] : memref<32x512xf32, #tpu.memory_space<vmem>>, vector<32x512xf32>
    tpu.vector_store %arg7[%c0_30, %c0_31], %64 {strides = array<i32>} : memref<32x512xf32, #tpu.memory_space<vmem>>, vector<32x512xf32>,
    return
  }
  func.func @transform_0(%arg0: i32) -> (i32, i32) {
    %c0_i32 = arith.constant 0 : i32
    %c0_i32_0 = arith.constant 0 : i32
    %c0_i32_1 = arith.constant 0 : i32
    return %c0_i32, %c0_i32_0 : i32, i32
  }
  func.func @transform_1(%arg0: i32) -> (i32, i32) {
    %c0_i32 = arith.constant 0 : i32
    %c0_i32_0 = arith.constant 0 : i32
    %c0_i32_1 = arith.constant 0 : i32
    return %c0_i32, %c0_i32_0 : i32, i32
  }
  func.func @transform_2(%arg0: i32) -> (i32, i32) {
    %c0_i32 = arith.constant 0 : i32
    %c0_i32_0 = arith.constant 0 : i32
    %c0_i32_1 = arith.constant 0 : i32
    return %c0_i32, %c0_i32_0 : i32, i32
  }
  func.func @transform_3(%arg0: i32) -> (i32, i32, i32) {
    %c0_i32 = arith.constant 0 : i32
    %c0_i32_0 = arith.constant 0 : i32
    %c0_i32_1 = arith.constant 0 : i32
    %c0_i32_2 = arith.constant 0 : i32
    return %c0_i32, %c0_i32_0, %c0_i32_1 : i32, i32, i32
  }
  func.func @transform_4(%arg0: i32) -> (i32, i32) {
    %c0_i32 = arith.constant 0 : i32
    %c0_i32_0 = arith.constant 0 : i32
    %c0_i32_1 = arith.constant 0 : i32
    return %c0_i32, %c0_i32_0 : i32, i32
  }
  func.func @transform_5(%arg0: i32) -> (i32, i32) {
    %c0_i32 = arith.constant 0 : i32
    %c0_i32_0 = arith.constant 0 : i32
    %c0_i32_1 = arith.constant 0 : i32
    return %c0_i32, %c0_i32_0 : i32, i32
  }
  func.func @transform_6(%arg0: i32) -> (i32, i32) {
    %c0_i32 = arith.constant 0 : i32
    %c0_i32_0 = arith.constant 0 : i32
    %c0_i32_1 = arith.constant 0 : i32
    return %c0_i32, %c0_i32_0 : i32, i32
  }
}

</mosaic_0001>

<llo_original>
// kernel: bam_pallas.1
$region0: #{bam_pallas.1}
  #allocation0 [shape = 'u32[]', space=smem, size = 0x4, offset = 0x4, fixed_abs, tag = 'smem constant byte address 0x4 - core index']
  #allocation1 [shape = 'u32[144,128]{1,0:T(1,128)}', space=vmem, size = 0x12000, scoped, tag = 'internal scratch']
  %s0 = inlined_call_operand.vmem [shape: f32[32,512], index: 0, kind: input, shape index: {}]
  %s1 = inlined_call_operand.vmem [shape: f32[512,34], index: 1, kind: input, shape index: {}]
  %s2 = inlined_call_operand.vmem [shape: f32[32,32], index: 2, kind: input, shape index: {}]
  %s3 = inlined_call_operand.vmem [shape: f32[3,32,96], index: 3, kind: input, shape index: {}]
  %s4 = inlined_call_operand.vmem [shape: f32[32,512], index: 4, kind: input, shape index: {}]
  %s5 = inlined_call_operand.vmem [shape: f32[8,512], index: 5, kind: input, shape index: {}]
  %s6 = inlined_call_operand.vmem [shape: f32[32,512], index: 6, kind: output, shape index: {}]
  %s7 = sld [smem:[#allocation0]]
  $region34: #{bam_pallas.1} parent=0
    _
  %s9 = ssub.s32 1, %s7
  %s10 = scalar_select 0, %s9, %s7
  // Predicated region
  $region2: #{bam_pallas.1} parent=0 // pred_check
    _
  $region3: #{bam_pallas.1} parent=0 // pred_check_branch
    %12 = sbr.rel (0) target = $region5
  $region4: #{bam_pallas.1} parent=0 // pred_region
    _
  $region5: #{bam_pallas.1} parent=0 // pred_fallthru
    _
  // Predicated region
  $region6: #{bam_pallas.1} parent=0 // pred_check
    _
  $region7: #{bam_pallas.1} parent=0 // pred_check_branch
    %14 = sbr.rel (0) target = $region9
  $region8: #{bam_pallas.1} parent=0 // pred_region
    _
  $region9: #{bam_pallas.1} parent=0 // pred_fallthru
    _
  // Predicated region
  $region10: #{bam_pallas.1} parent=0 // pred_check
    _
  $region11: #{bam_pallas.1} parent=0 // pred_check_branch
    %16 = sbr.rel (0) target = $region13
  $region12: #{bam_pallas.1} parent=0 // pred_region
    _
  $region13: #{bam_pallas.1} parent=0 // pred_fallthru
    _
  // Predicated region
  $region14: #{bam_pallas.1} parent=0 // pred_check
    _
  $region15: #{bam_pallas.1} parent=0 // pred_check_branch
    %18 = sbr.rel (0) target = $region17
  $region16: #{bam_pallas.1} parent=0 // pred_region
    _
  $region17: #{bam_pallas.1} parent=0 // pred_fallthru
    _
  // Predicated region
  $region18: #{bam_pallas.1} parent=0 // pred_check
    _
  $region19: #{bam_pallas.1} parent=0 // pred_check_branch
    %20 = sbr.rel (0) target = $region21
  $region20: #{bam_pallas.1} parent=0 // pred_region
    _
  $region21: #{bam_pallas.1} parent=0 // pred_fallthru
    _
  // Predicated region
  $region22: #{bam_pallas.1} parent=0 // pred_check
    _
  $region23: #{bam_pallas.1} parent=0 // pred_check_branch
    %22 = sbr.rel (0) target = $region25
  $region24: #{bam_pallas.1} parent=0 // pred_region
    _
  $region25: #{bam_pallas.1} parent=0 // pred_fallthru
    _
  %v23 = vld [vmem:[%s0] sm:$0xff]
  %v24 = vld [vmem:[%s0 + $0x8] sm:$0xff]
  %v25 = vld [vmem:[%s0 + $0x10] sm:$0xff]
  %v26 = vld [vmem:[%s0 + $0x18] sm:$0xff]
  %v27 = vld [vmem:[%s0 + $0x20] sm:$0xff]
  %v28 = vld [vmem:[%s0 + $0x28] sm:$0xff]
  %v29 = vld [vmem:[%s0 + $0x30] sm:$0xff]
  %v30 = vld [vmem:[%s0 + $0x38] sm:$0xff]
  %v31 = vld [vmem:[%s0 + $0x40] sm:$0xff]
  %v32 = vld [vmem:[%s0 + $0x48] sm:$0xff]
  %v33 = vld [vmem:[%s0 + $0x50] sm:$0xff]
  %v34 = vld [vmem:[%s0 + $0x58] sm:$0xff]
  %v35 = vld [vmem:[%s0 + $0x60] sm:$0xff]
  %v36 = vld [vmem:[%s0 + $0x68] sm:$0xff]
  %v37 = vld [vmem:[%s0 + $0x70] sm:$0xff]
  %v38 = vld [vmem:[%s0 + $0x78] sm:$0xff]
  %v39 = vld [vmem:[%s5] sm:$0xff]
  %v40 = vld [vmem:[%s5 + $0x8] sm:$0xff]
  %v41 = vld [vmem:[%s5 + $0x10] sm:$0xff]
  %v42 = vld [vmem:[%s5 + $0x18] sm:$0xff]
  %v43 = vld [vmem:[%s1] sm:$0xff]
  %v44 = vld [vmem:[%s1 + $0x8] sm:$0xff]
  %v45 = vld [vmem:[%s1 + $0x10] sm:$0xff]
  %v46 = vld [vmem:[%s1 + $0x18] sm:$0xff]
  %v47 = vld [vmem:[%s1 + $0x20] sm:$0xff]
  %v48 = vld [vmem:[%s1 + $0x28] sm:$0xff]
  %v49 = vld [vmem:[%s1 + $0x30] sm:$0xff]
  %v50 = vld [vmem:[%s1 + $0x38] sm:$0xff]
  %v51 = vld [vmem:[%s1 + $0x40] sm:$0xff]
  %v52 = vld [vmem:[%s1 + $0x48] sm:$0xff]
  %v53 = vld [vmem:[%s1 + $0x50] sm:$0xff]
  %v54 = vld [vmem:[%s1 + $0x58] sm:$0xff]
  %v55 = vld [vmem:[%s1 + $0x60] sm:$0xff]
  %v56 = vld [vmem:[%s1 + $0x68] sm:$0xff]
  %v57 = vld [vmem:[%s1 + $0x70] sm:$0xff]
  %v58 = vld [vmem:[%s1 + $0x78] sm:$0xff]
  %v59 = vld [vmem:[%s1 + $0x80] sm:$0xff]
  %v60 = vld [vmem:[%s1 + $0x88] sm:$0xff]
  %v61 = vld [vmem:[%s1 + $0x90] sm:$0xff]
  %v62 = vld [vmem:[%s1 + $0x98] sm:$0xff]
  %v63 = vld [vmem:[%s1 + $0xa0] sm:$0xff]
  %v64 = vld [vmem:[%s1 + $0xa8] sm:$0xff]
  %v65 = vld [vmem:[%s1 + $0xb0] sm:$0xff]
  %v66 = vld [vmem:[%s1 + $0xb8] sm:$0xff]
  %v67 = vld [vmem:[%s1 + $0xc0] sm:$0xff]
  %v68 = vld [vmem:[%s1 + $0xc8] sm:$0xff]
  %v69 = vld [vmem:[%s1 + $0xd0] sm:$0xff]
  %v70 = vld [vmem:[%s1 + $0xd8] sm:$0xff]
  %v71 = vld [vmem:[%s1 + $0xe0] sm:$0xff]
  %v72 = vld [vmem:[%s1 + $0xe8] sm:$0xff]
  %v73 = vld [vmem:[%s1 + $0xf0] sm:$0xff]
  %v74 = vld [vmem:[%s1 + $0xf8] sm:$0xff]
  %v75 = vld [vmem:[%s1 + $0x100] sm:$0xff]
  %v76 = vld [vmem:[%s1 + $0x108] sm:$0xff]
  %v77 = vld [vmem:[%s1 + $0x110] sm:$0xff]
  %v78 = vld [vmem:[%s1 + $0x118] sm:$0xff]
  %v79 = vld [vmem:[%s1 + $0x120] sm:$0xff]
  %v80 = vld [vmem:[%s1 + $0x128] sm:$0xff]
  %v81 = vld [vmem:[%s1 + $0x130] sm:$0xff]
  %v82 = vld [vmem:[%s1 + $0x138] sm:$0xff]
  %v83 = vld [vmem:[%s1 + $0x140] sm:$0xff]
  %v84 = vld [vmem:[%s1 + $0x148] sm:$0xff]
  %v85 = vld [vmem:[%s1 + $0x150] sm:$0xff]
  %v86 = vld [vmem:[%s1 + $0x158] sm:$0xff]
  %v87 = vld [vmem:[%s1 + $0x160] sm:$0xff]
  %v88 = vld [vmem:[%s1 + $0x168] sm:$0xff]
  %v89 = vld [vmem:[%s1 + $0x170] sm:$0xff]
  %v90 = vld [vmem:[%s1 + $0x178] sm:$0xff]
  %v91 = vld [vmem:[%s1 + $0x180] sm:$0xff]
  %v92 = vld [vmem:[%s1 + $0x188] sm:$0xff]
  %v93 = vld [vmem:[%s1 + $0x190] sm:$0xff]
  %v94 = vld [vmem:[%s1 + $0x198] sm:$0xff]
  %v95 = vld [vmem:[%s1 + $0x1a0] sm:$0xff]
  %v96 = vld [vmem:[%s1 + $0x1a8] sm:$0xff]
  %v97 = vld [vmem:[%s1 + $0x1b0] sm:$0xff]
  %v98 = vld [vmem:[%s1 + $0x1b8] sm:$0xff]
  %v99 = vld [vmem:[%s1 + $0x1c0] sm:$0xff]
  %v100 = vld [vmem:[%s1 + $0x1c8] sm:$0xff]
  %v101 = vld [vmem:[%s1 + $0x1d0] sm:$0xff]
  %v102 = vld [vmem:[%s1 + $0x1d8] sm:$0xff]
  %v103 = vld [vmem:[%s1 + $0x1e0] sm:$0xff]
  %v104 = vld [vmem:[%s1 + $0x1e8] sm:$0xff]
  %v105 = vld [vmem:[%s1 + $0x1f0] sm:$0xff]
  %v106 = vld [vmem:[%s1 + $0x1f8] sm:$0xff]
  %107 = vmatprep.subr.mxu0 0.0
  %108 = vmatpush1.msra.mxu0 %v58
  %109 = vmatprep.subr.mxu0 0.0
  %110 = vmatpush1.msra.mxu0 %v57
  %111 = vmatprep.subr.mxu0 0.0
  %112 = vmatpush1.msra.mxu0 %v56
  %113 = vmatprep.subr.mxu0 0.0
  %114 = vmatpush1.msra.mxu0 %v55
  %115 = vmatprep.subr.mxu0 0.0
  %116 = vmatpush1.msra.mxu0 %v54
  %117 = vmatprep.subr.mxu0 0.0
  %118 = vmatpush1.msra.mxu0 %v53
  %119 = vmatprep.subr.mxu0 0.0
  %120 = vmatpush1.msra.mxu0 %v52
  %121 = vmatprep.subr.mxu0 0.0
  %122 = vmatpush1.msra.mxu0 %v51
  %123 = vmatprep.subr.mxu0 0.0
  %124 = vmatpush1.msra.mxu0 %v50
  %125 = vmatprep.subr.mxu0 0.0
  %126 = vmatpush1.msra.mxu0 %v49
  %127 = vmatprep.subr.mxu0 0.0
  %128 = vmatpush1.msra.mxu0 %v48
  %129 = vmatprep.subr.mxu0 0.0
  %130 = vmatpush1.msra.mxu0 %v47
  %131 = vmatprep.subr.mxu0 0.0
  %132 = vmatpush1.msra.mxu0 %v46
  %133 = vmatprep.subr.mxu0 0.0
  %134 = vmatpush1.msra.mxu0 %v45
  %135 = vmatprep.subr.mxu0 0.0
  %136 = vmatpush1.msra.mxu0 %v44
  %137 = vmatprep.subr.mxu0 0.0
  %138 = vmatpush1.msra.mxu0 %v43
  %139 = vmatprep.subr.mxu0 0.0
  %140 = vmatpush2.msra.mxu0 %v74
  %141 = vmatprep.subr.mxu0 0.0
  %142 = vmatpush2.msra.mxu0 %v73
  %143 = vmatprep.subr.mxu0 0.0
  %144 = vmatpush2.msra.mxu0 %v72
  %145 = vmatprep.subr.mxu0 0.0
  %146 = vmatpush2.msra.mxu0 %v71
  %147 = vmatprep.subr.mxu0 0.0
  %148 = vmatpush2.msra.mxu0 %v70
  %149 = vmatprep.subr.mxu0 0.0
  %150 = vmatpush2.msra.mxu0 %v69
  %151 = vmatprep.subr.mxu0 0.0
  %152 = vmatpush2.msra.mxu0 %v68
  %153 = vmatprep.subr.mxu0 0.0
  %154 = vmatpush2.msra.mxu0 %v67
  %155 = vmatprep.subr.mxu0 0.0
  %156 = vmatpush2.msra.mxu0 %v66
  %157 = vmatprep.subr.mxu0 0.0
  %158 = vmatpush2.msra.mxu0 %v65
  %159 = vmatprep.subr.mxu0 0.0
  %160 = vmatpush2.msra.mxu0 %v64
  %161 = vmatprep.subr.mxu0 0.0
  %162 = vmatpush2.msra.mxu0 %v63
  %163 = vmatprep.subr.mxu0 0.0
  %164 = vmatpush2.msra.mxu0 %v62
  %165 = vmatprep.subr.mxu0 0.0
  %166 = vmatpush2.msra.mxu0 %v61
  %167 = vmatprep.subr.mxu0 0.0
  %168 = vmatpush2.msra.mxu0 %v60
  %169 = vmatprep.subr.mxu0 0.0
  %170 = vmatpush2.msra.mxu0 %v59
  %171 = vmatprep.mubr.f32.mxu0 %v24
  %172 = vmatmul.mubr.f32.gmra.mxu0 %v23
  %v173 = vpop.f32.mrf.mxu0
  %v174 = vadd.f32 0.0, %v173
  %v175 = vpop.f32.mrf.mxu0
  %176 = vmatprep.mubr.f32.mxu0 %v28
  %177 = vmatmul.mubr.f32.gmra.mxu0 %v27
  %v178 = vpop.f32.mrf.mxu0
  %v179 = vadd.f32 0.0, %v178
  %v180 = vpop.f32.mrf.mxu0
  %181 = vmatprep.mubr.f32.mxu0 %v32
  %182 = vmatmul.mubr.f32.gmra.mxu0 %v31
  %v183 = vpop.f32.mrf.mxu0
  %v184 = vadd.f32 0.0, %v183
  %v185 = vpop.f32.mrf.mxu0
  %186 = vmatprep.mubr.f32.mxu0 %v36
  %187 = vmatmul.mubr.f32.gmra.mxu0 %v35
  %v188 = vpop.f32.mrf.mxu0
  %v189 = vadd.f32 0.0, %v188
  %v190 = vpop.f32.mrf.mxu0
  %191 = vdwg.mxu0
  %192 = vmatprep.subr.mxu0 0.0
  %193 = vmatpush1.msra.mxu0 %v90
  %194 = vmatprep.subr.mxu0 0.0
  %195 = vmatpush1.msra.mxu0 %v89
  %196 = vmatprep.subr.mxu0 0.0
  %197 = vmatpush1.msra.mxu0 %v88
  %198 = vmatprep.subr.mxu0 0.0
  %199 = vmatpush1.msra.mxu0 %v87
  %200 = vmatprep.subr.mxu0 0.0
  %201 = vmatpush1.msra.mxu0 %v86
  %202 = vmatprep.subr.mxu0 0.0
  %203 = vmatpush1.msra.mxu0 %v85
  %204 = vmatprep.subr.mxu0 0.0
  %205 = vmatpush1.msra.mxu0 %v84
  %206 = vmatprep.subr.mxu0 0.0
  %207 = vmatpush1.msra.mxu0 %v83
  %208 = vmatprep.subr.mxu0 0.0
  %209 = vmatpush1.msra.mxu0 %v82
  %210 = vmatprep.subr.mxu0 0.0
  %211 = vmatpush1.msra.mxu0 %v81
  %212 = vmatprep.subr.mxu0 0.0
  %213 = vmatpush1.msra.mxu0 %v80
  %214 = vmatprep.subr.mxu0 0.0
  %215 = vmatpush1.msra.mxu0 %v79
  %216 = vmatprep.subr.mxu0 0.0
  %217 = vmatpush1.msra.mxu0 %v78
  %218 = vmatprep.subr.mxu0 0.0
  %219 = vmatpush1.msra.mxu0 %v77
  %220 = vmatprep.subr.mxu0 0.0
  %221 = vmatpush1.msra.mxu0 %v76
  %222 = vmatprep.subr.mxu0 0.0
  %223 = vmatpush1.msra.mxu0 %v75
  %224 = vmatprep.subr.mxu0 0.0
  %225 = vmatpush2.msra.mxu0 %v106
  %226 = vmatprep.subr.mxu0 0.0
  %227 = vmatpush2.msra.mxu0 %v105
  %228 = vmatprep.subr.mxu0 0.0
  %229 = vmatpush2.msra.mxu0 %v104
  %230 = vmatprep.subr.mxu0 0.0
  %231 = vmatpush2.msra.mxu0 %v103
  %232 = vmatprep.subr.mxu0 0.0
  %233 = vmatpush2.msra.mxu0 %v102
  %234 = vmatprep.subr.mxu0 0.0
  %235 = vmatpush2.msra.mxu0 %v101
  %236 = vmatprep.subr.mxu0 0.0
  %237 = vmatpush2.msra.mxu0 %v100
  %238 = vmatprep.subr.mxu0 0.0
  %239 = vmatpush2.msra.mxu0 %v99
  %240 = vmatprep.subr.mxu0 0.0
  %241 = vmatpush2.msra.mxu0 %v98
  %242 = vmatprep.subr.mxu0 0.0
  %243 = vmatpush2.msra.mxu0 %v97
  %244 = vmatprep.subr.mxu0 0.0
  %245 = vmatpush2.msra.mxu0 %v96
  %246 = vmatprep.subr.mxu0 0.0
  %247 = vmatpush2.msra.mxu0 %v95
  %248 = vmatprep.subr.mxu0 0.0
  %249 = vmatpush2.msra.mxu0 %v94
  %250 = vmatprep.subr.mxu0 0.0
  %251 = vmatpush2.msra.mxu0 %v93
  %252 = vmatprep.subr.mxu0 0.0
  %253 = vmatpush2.msra.mxu0 %v92
  %254 = vmatprep.subr.mxu0 0.0
  %255 = vmatpush2.msra.mxu0 %v91
  %256 = vmatprep.mubr.f32.mxu0 %v26
  %257 = vmatmul.mubr.f32.gmra.mxu0 %v25
  %v258 = vpop.f32.mrf.mxu0
  %v259 = vadd.f32 %v174, %v258
  %v260 = vpop.f32.mrf.mxu0
  %261 = vmatprep.mubr.f32.mxu0 %v30
  %262 = vmatmul.mubr.f32.gmra.mxu0 %v29
  %v263 = vpop.f32.mrf.mxu0
  %v264 = vadd.f32 %v179, %v263
  %v265 = vpop.f32.mrf.mxu0
  %266 = vmatprep.mubr.f32.mxu0 %v34
  %267 = vmatmul.mubr.f32.gmra.mxu0 %v33
  %v268 = vpop.f32.mrf.mxu0
  %v269 = vadd.f32 %v184, %v268
  %v270 = vpop.f32.mrf.mxu0
  %271 = vmatprep.mubr.f32.mxu0 %v38
  %272 = vmatmul.mubr.f32.gmra.mxu0 %v37
  %v273 = vpop.f32.mrf.mxu0
  %v274 = vadd.f32 %v189, %v273
  %v275 = vpop.f32.mrf.mxu0
  %276 = vdwg.mxu0
  %v277 = vld [vmem:[%s2] sm:$0xff]
  %v278 = vld [vmem:[%s2 + $0x8] sm:$0xff]
  %v279 = vld [vmem:[%s2 + $0x10] sm:$0xff]
  %v280 = vld [vmem:[%s2 + $0x18] sm:$0xff]
  %v281 = vlaneseq
  %v282 = vshrl.u32 %v281, 7
  %v283 = vsub.s32 6, %v282
  %v284 = vrot.slane %v39, %v283
  %289 = vrot.lane.b32.xlu0 %v259, 96
  %v290 = vpop.permute.xlu0 %289
  %291 = vrot.lane.b32.xlu0 %v264, 96
  %v292 = vpop.permute.xlu0 %291
  %293 = vrot.lane.b32.xlu0 %v269, 96
  %v294 = vpop.permute.xlu0 %293
  %295 = vrot.lane.b32.xlu0 %v274, 96
  %v296 = vpop.permute.xlu0 %295
  %vm301 = vcmask 261120
  %v303 = vsel %vm301, %v277, 0
  %v306 = vsel %vm301, %v278, 0
  %v309 = vsel %vm301, %v279, 0
  %v312 = vsel %vm301, %v280, 0
  %314 = vmatprep.subr.mxu0 0.0
  %315 = vmatpush1.msra.mxu0 0.0
  %316 = vmatprep.subr.mxu0 0.0
  %317 = vmatpush1.msra.mxu0 0.0
  %318 = vmatprep.subr.mxu0 0.0
  %319 = vmatpush1.msra.mxu0 0.0
  %320 = vmatprep.subr.mxu0 0.0
  %321 = vmatpush1.msra.mxu0 0.0
  %322 = vmatprep.subr.mxu0 0.0
  %323 = vmatpush1.msra.mxu0 0.0
  %324 = vmatprep.subr.mxu0 0.0
  %325 = vmatpush1.msra.mxu0 0.0
  %326 = vmatprep.subr.mxu0 0.0
  %327 = vmatpush1.msra.mxu0 0.0
  %328 = vmatprep.subr.mxu0 0.0
  %329 = vmatpush1.msra.mxu0 0.0
  %330 = vmatprep.subr.mxu0 0.0
  %331 = vmatpush1.msra.mxu0 0.0
  %332 = vmatprep.subr.mxu0 0.0
  %333 = vmatpush1.msra.mxu0 0.0
  %334 = vmatprep.subr.mxu0 0.0
  %335 = vmatpush1.msra.mxu0 0.0
  %336 = vmatprep.subr.mxu0 0.0
  %337 = vmatpush1.msra.mxu0 0.0
  %338 = vmatprep.subr.mxu0 0.0
  %339 = vmatpush1.msra.mxu0 %v296
  %340 = vmatprep.subr.mxu0 0.0
  %341 = vmatpush1.msra.mxu0 %v294
  %342 = vmatprep.subr.mxu0 0.0
  %343 = vmatpush1.msra.mxu0 %v292
  %344 = vmatprep.subr.mxu0 0.0
  %345 = vmatpush1.msra.mxu0 %v290
  %346 = vmatprep.subr.mxu0 0.0
  %347 = vmatpush2.msra.mxu0 0.0
  %348 = vmatprep.subr.mxu0 0.0
  %349 = vmatpush2.msra.mxu0 0.0
  %350 = vmatprep.subr.mxu0 0.0
  %351 = vmatpush2.msra.mxu0 0.0
  %352 = vmatprep.subr.mxu0 0.0
  %353 = vmatpush2.msra.mxu0 0.0
  %354 = vmatprep.subr.mxu0 0.0
  %355 = vmatpush2.msra.mxu0 0.0
  %356 = vmatprep.subr.mxu0 0.0
  %357 = vmatpush2.msra.mxu0 0.0
  %358 = vmatprep.subr.mxu0 0.0
  %359 = vmatpush2.msra.mxu0 0.0
  %360 = vmatprep.subr.mxu0 0.0
  %361 = vmatpush2.msra.mxu0 0.0
  %362 = vmatprep.subr.mxu0 0.0
  %363 = vmatpush2.msra.mxu0 0.0
  %364 = vmatprep.subr.mxu0 0.0
  %365 = vmatpush2.msra.mxu0 0.0
  %366 = vmatprep.subr.mxu0 0.0
  %367 = vmatpush2.msra.mxu0 0.0
  %368 = vmatprep.subr.mxu0 0.0
  %369 = vmatpush2.msra.mxu0 0.0
  %370 = vmatprep.subr.mxu0 0.0
  %371 = vmatpush2.msra.mxu0 0.0
  %372 = vmatprep.subr.mxu0 0.0
  %373 = vmatpush2.msra.mxu0 0.0
  %374 = vmatprep.subr.mxu0 0.0
  %375 = vmatpush2.msra.mxu0 0.0
  %376 = vmatprep.subr.mxu0 0.0
  %377 = vmatpush2.msra.mxu0 0.0
  %378 = vmatprep.mubr.f32.mxu0 0.0
  %379 = vmatmul.mubr.f32.gmra.mxu0 %v303
  %v380 = vpop.f32.mrf.mxu0
  %v381 = vadd.f32 %v284, %v380
  %v382 = vpop.f32.mrf.mxu0
  %383 = vmatprep.mubr.f32.mxu0 0.0
  %384 = vmatmul.mubr.f32.gmra.mxu0 %v306
  %v385 = vpop.f32.mrf.mxu0
  %v386 = vadd.f32 %v284, %v385
  %v387 = vpop.f32.mrf.mxu0
  %388 = vmatprep.mubr.f32.mxu0 0.0
  %389 = vmatmul.mubr.f32.gmra.mxu0 %v309
  %v390 = vpop.f32.mrf.mxu0
  %v391 = vadd.f32 %v284, %v390
  %v392 = vpop.f32.mrf.mxu0
  %393 = vmatprep.mubr.f32.mxu0 0.0
  %394 = vmatmul.mubr.f32.gmra.mxu0 %v312
  %v395 = vpop.f32.mrf.mxu0
  %v396 = vadd.f32 %v284, %v395
  %v397 = vpop.f32.mrf.mxu0
  %398 = vdwg.mxu0
  %v399 = vmax.f32 %v381, 0.0
  %v400 = vmax.f32 %v386, 0.0
  %v401 = vmax.f32 %v391, 0.0
  %v402 = vmax.f32 %v396, 0.0
  %v403 = vlaneseq
  %v404 = vshrl.u32 %v403, 7
  %v405 = vsub.s32 2, %v404
  %v406 = vrot.slane %v39, %v405
  %v407 = vlaneseq
  %v408 = vshrl.u32 %v407, 7
  %v409 = vsub.s32 2, %v408
  %v410 = vrot.slane %v40, %v409
  %v411 = vlaneseq
  %v412 = vshrl.u32 %v411, 7
  %v413 = vsub.s32 2, %v412
  %v414 = vrot.slane %v41, %v413
  %v415 = vlaneseq
  %v416 = vshrl.u32 %v415, 7
  %v417 = vsub.s32 2, %v416
  %v418 = vrot.slane %v42, %v417
  %vm419 = vcmask 15360
  %v421 = vsel %vm419, %v399, 0
  %v424 = vsel %vm419, %v400, 0
  %v427 = vsel %vm419, %v401, 0
  %v430 = vsel %vm419, %v402, 0
  %vm432 = vcmask 1041408
  %v434 = vsel %vm432, %v39, 0
  %v437 = vsel %vm432, %v40, 0
  %v440 = vsel %vm432, %v41, 0
  %v443 = vsel %vm432, %v42, 0
  %445 = vmatprep.subr.mxu0 0.0
  %446 = vmatpush1.msra.mxu0 0.0
  %447 = vmatprep.subr.mxu0 0.0
  %448 = vmatpush1.msra.mxu0 0.0
  %449 = vmatprep.subr.mxu0 0.0
  %450 = vmatpush1.msra.mxu0 0.0
  %451 = vmatprep.subr.mxu0 0.0
  %452 = vmatpush1.msra.mxu0 0.0
  %453 = vmatprep.subr.mxu0 0.0
  %454 = vmatpush1.msra.mxu0 0.0
  %455 = vmatprep.subr.mxu0 0.0
  %456 = vmatpush1.msra.mxu0 0.0
  %457 = vmatprep.subr.mxu0 0.0
  %458 = vmatpush1.msra.mxu0 0.0
  %459 = vmatprep.subr.mxu0 0.0
  %460 = vmatpush1.msra.mxu0 0.0
  %461 = vmatprep.subr.mxu0 0.0
  %462 = vmatpush1.msra.mxu0 0.0
  %463 = vmatprep.subr.mxu0 0.0
  %464 = vmatpush1.msra.mxu0 0.0
  %465 = vmatprep.subr.mxu0 0.0
  %466 = vmatpush1.msra.mxu0 0.0
  %467 = vmatprep.subr.mxu0 0.0
  %468 = vmatpush1.msra.mxu0 0.0
  %469 = vmatprep.subr.mxu0 0.0
  %470 = vmatpush1.msra.mxu0 0.0
  %471 = vmatprep.subr.mxu0 0.0
  %472 = vmatpush1.msra.mxu0 0.0
  %473 = vmatprep.subr.mxu0 0.0
  %474 = vmatpush1.msra.mxu0 0.0
  %475 = vmatprep.subr.mxu0 %v437
  %476 = vmatpush1.msra.mxu0 %v434
  %477 = vmatprep.subr.mxu0 0.0
  %478 = vmatpush2.msra.mxu0 0.0
  %479 = vmatprep.subr.mxu0 0.0
  %480 = vmatpush2.msra.mxu0 0.0
  %481 = vmatprep.subr.mxu0 0.0
  %482 = vmatpush2.msra.mxu0 0.0
  %483 = vmatprep.subr.mxu0 0.0
  %484 = vmatpush2.msra.mxu0 0.0
  %485 = vmatprep.subr.mxu0 0.0
  %486 = vmatpush2.msra.mxu0 0.0
  %487 = vmatprep.subr.mxu0 0.0
  %488 = vmatpush2.msra.mxu0 0.0
  %489 = vmatprep.subr.mxu0 0.0
  %490 = vmatpush2.msra.mxu0 0.0
  %491 = vmatprep.subr.mxu0 0.0
  %492 = vmatpush2.msra.mxu0 0.0
  %493 = vmatprep.subr.mxu0 0.0
  %494 = vmatpush2.msra.mxu0 0.0
  %495 = vmatprep.subr.mxu0 0.0
  %496 = vmatpush2.msra.mxu0 0.0
  %497 = vmatprep.subr.mxu0 0.0
  %498 = vmatpush2.msra.mxu0 0.0
  %499 = vmatprep.subr.mxu0 0.0
  %500 = vmatpush2.msra.mxu0 0.0
  %501 = vmatprep.subr.mxu0 0.0
  %502 = vmatpush2.msra.mxu0 0.0
  %503 = vmatprep.subr.mxu0 0.0
  %504 = vmatpush2.msra.mxu0 0.0
  %505 = vmatprep.subr.mxu0 0.0
  %506 = vmatpush2.msra.mxu0 0.0
  %507 = vmatprep.subr.mxu0 0.0
  %508 = vmatpush2.msra.mxu0 0.0
  %509 = vmatprep.mubr.f32.mxu0 0.0
  %510 = vmatmul.mubr.f32.gmra.mxu0 %v421
  %v511 = vpop.f32.mrf.mxu0
  %v512 = vadd.f32 %v406, %v511
  %v513 = vpop.f32.mrf.mxu0
  %v514 = vadd.f32 %v410, %v513
  %515 = vmatprep.mubr.f32.mxu0 0.0
  %516 = vmatmul.mubr.f32.gmra.mxu0 %v424
  %v517 = vpop.f32.mrf.mxu0
  %v518 = vadd.f32 %v406, %v517
  %v519 = vpop.f32.mrf.mxu0
  %v520 = vadd.f32 %v410, %v519
  %521 = vmatprep.mubr.f32.mxu0 0.0
  %522 = vmatmul.mubr.f32.gmra.mxu0 %v427
  %v523 = vpop.f32.mrf.mxu0
  %v524 = vadd.f32 %v406, %v523
  %v525 = vpop.f32.mrf.mxu0
  %v526 = vadd.f32 %v410, %v525
  %527 = vmatprep.mubr.f32.mxu0 0.0
  %528 = vmatmul.mubr.f32.gmra.mxu0 %v430
  %v529 = vpop.f32.mrf.mxu0
  %v530 = vadd.f32 %v406, %v529
  %v531 = vpop.f32.mrf.mxu0
  %v532 = vadd.f32 %v410, %v531
  %533 = vdwg.mxu0
  %534 = vmatprep.subr.mxu0 0.0
  %535 = vmatpush1.msra.mxu0 0.0
  %536 = vmatprep.subr.mxu0 0.0
  %537 = vmatpush1.msra.mxu0 0.0
  %538 = vmatprep.subr.mxu0 0.0
  %539 = vmatpush1.msra.mxu0 0.0
  %540 = vmatprep.subr.mxu0 0.0
  %541 = vmatpush1.msra.mxu0 0.0
  %542 = vmatprep.subr.mxu0 0.0
  %543 = vmatpush1.msra.mxu0 0.0
  %544 = vmatprep.subr.mxu0 0.0
  %545 = vmatpush1.msra.mxu0 0.0
  %546 = vmatprep.subr.mxu0 0.0
  %547 = vmatpush1.msra.mxu0 0.0
  %548 = vmatprep.subr.mxu0 0.0
  %549 = vmatpush1.msra.mxu0 0.0
  %550 = vmatprep.subr.mxu0 0.0
  %551 = vmatpush1.msra.mxu0 0.0
  %552 = vmatprep.subr.mxu0 0.0
  %553 = vmatpush1.msra.mxu0 0.0
  %554 = vmatprep.subr.mxu0 0.0
  %555 = vmatpush1.msra.mxu0 0.0
  %556 = vmatprep.subr.mxu0 0.0
  %557 = vmatpush1.msra.mxu0 0.0
  %558 = vmatprep.subr.mxu0 0.0
  %559 = vmatpush1.msra.mxu0 0.0
  %560 = vmatprep.subr.mxu0 0.0
  %561 = vmatpush1.msra.mxu0 0.0
  %562 = vmatprep.subr.mxu0 0.0
  %563 = vmatpush1.msra.mxu0 0.0
  %564 = vmatprep.subr.mxu0 %v443
  %565 = vmatpush1.msra.mxu0 %v440
  %566 = vmatprep.subr.mxu0 0.0
  %567 = vmatpush2.msra.mxu0 0.0
  %568 = vmatprep.subr.mxu0 0.0
  %569 = vmatpush2.msra.mxu0 0.0
  %570 = vmatprep.subr.mxu0 0.0
  %571 = vmatpush2.msra.mxu0 0.0
  %572 = vmatprep.subr.mxu0 0.0
  %573 = vmatpush2.msra.mxu0 0.0
  %574 = vmatprep.subr.mxu0 0.0
  %575 = vmatpush2.msra.mxu0 0.0
  %576 = vmatprep.subr.mxu0 0.0
  %577 = vmatpush2.msra.mxu0 0.0
  %578 = vmatprep.subr.mxu0 0.0
  %579 = vmatpush2.msra.mxu0 0.0
  %580 = vmatprep.subr.mxu0 0.0
  %581 = vmatpush2.msra.mxu0 0.0
  %582 = vmatprep.subr.mxu0 0.0
  %583 = vmatpush2.msra.mxu0 0.0
  %584 = vmatprep.subr.mxu0 0.0
  %585 = vmatpush2.msra.mxu0 0.0
  %586 = vmatprep.subr.mxu0 0.0
  %587 = vmatpush2.msra.mxu0 0.0
  %588 = vmatprep.subr.mxu0 0.0
  %589 = vmatpush2.msra.mxu0 0.0
  %590 = vmatprep.subr.mxu0 0.0
  %591 = vmatpush2.msra.mxu0 0.0
  %592 = vmatprep.subr.mxu0 0.0
  %593 = vmatpush2.msra.mxu0 0.0
  %594 = vmatprep.subr.mxu0 0.0
  %595 = vmatpush2.msra.mxu0 0.0
  %596 = vmatprep.subr.mxu0 0.0
  %597 = vmatpush2.msra.mxu0 0.0
  %598 = vmatprep.mubr.f32.mxu0 0.0
  %599 = vmatmul.mubr.f32.gmra.mxu0 %v421
  %v600 = vpop.f32.mrf.mxu0
  %v601 = vadd.f32 %v414, %v600
  %v602 = vpop.f32.mrf.mxu0
  %v603 = vadd.f32 %v418, %v602
  %604 = vmatprep.mubr.f32.mxu0 0.0
  %605 = vmatmul.mubr.f32.gmra.mxu0 %v424
  %v606 = vpop.f32.mrf.mxu0
  %v607 = vadd.f32 %v414, %v606
  %v608 = vpop.f32.mrf.mxu0
  %v609 = vadd.f32 %v418, %v608
  %610 = vmatprep.mubr.f32.mxu0 0.0
  %611 = vmatmul.mubr.f32.gmra.mxu0 %v427
  %v612 = vpop.f32.mrf.mxu0
  %v613 = vadd.f32 %v414, %v612
  %v614 = vpop.f32.mrf.mxu0
  %v615 = vadd.f32 %v418, %v614
  %616 = vmatprep.mubr.f32.mxu0 0.0
  %617 = vmatmul.mubr.f32.gmra.mxu0 %v430
  %v618 = vpop.f32.mrf.mxu0
  %v619 = vadd.f32 %v414, %v618
  %v620 = vpop.f32.mrf.mxu0
  %v621 = vadd.f32 %v418, %v620
  %622 = vdwg.mxu0
  %v623 = vlaneseq
  %v624 = vshrl.u32 %v623, 7
  %v625 = vsub.s32 3, %v624
  %v626 = vrot.slane %v39, %v625
  %v627 = vadd.f32 %v259, %v626
  %v628 = vadd.f32 %v264, %v626
  %v629 = vadd.f32 %v269, %v626
  %v630 = vadd.f32 %v274, %v626
  %v631 = vmax.f32 %v627, 0.0
  %v632 = vmax.f32 %v628, 0.0
  %v633 = vmax.f32 %v629, 0.0
  %v634 = vmax.f32 %v630, 0.0
  %v635 = vld [vmem:[%s3] sm:$0xff]
  %v636 = vld [vmem:[%s3 + $0x8] sm:$0xff]
  %v637 = vld [vmem:[%s3 + $0x10] sm:$0xff]
  %v638 = vld [vmem:[%s3 + $0x18] sm:$0xff]
  %s639 = scalar_lea.vmem %s3, 32
  %v640 = vld [vmem:[%s639] sm:$0xff]
  %v641 = vld [vmem:[%s639 + $0x8] sm:$0xff]
  %v642 = vld [vmem:[%s639 + $0x10] sm:$0xff]
  %v643 = vld [vmem:[%s639 + $0x18] sm:$0xff]
  %v645 = vsel %vm301, %v631, 0
  %v648 = vsel %vm301, %v632, 0
  %v651 = vsel %vm301, %v633, 0
  %v654 = vsel %vm301, %v634, 0
  %656 = vmatprep.subr.mxu0 0.0
  %657 = vmatpush1.msra.mxu0 0.0
  %658 = vmatprep.subr.mxu0 0.0
  %659 = vmatpush1.msra.mxu0 0.0
  %660 = vmatprep.subr.mxu0 0.0
  %661 = vmatpush1.msra.mxu0 0.0
  %662 = vmatprep.subr.mxu0 0.0
  %663 = vmatpush1.msra.mxu0 0.0
  %664 = vmatprep.subr.mxu0 0.0
  %665 = vmatpush1.msra.mxu0 0.0
  %666 = vmatprep.subr.mxu0 0.0
  %667 = vmatpush1.msra.mxu0 0.0
  %668 = vmatprep.subr.mxu0 0.0
  %669 = vmatpush1.msra.mxu0 0.0
  %670 = vmatprep.subr.mxu0 0.0
  %671 = vmatpush1.msra.mxu0 0.0
  %672 = vmatprep.subr.mxu0 0.0
  %673 = vmatpush1.msra.mxu0 0.0
  %674 = vmatprep.subr.mxu0 0.0
  %675 = vmatpush1.msra.mxu0 0.0
  %676 = vmatprep.subr.mxu0 0.0
  %677 = vmatpush1.msra.mxu0 0.0
  %678 = vmatprep.subr.mxu0 0.0
  %679 = vmatpush1.msra.mxu0 0.0
  %680 = vmatprep.subr.mxu0 0.0
  %681 = vmatpush1.msra.mxu0 %v643
  %682 = vmatprep.subr.mxu0 0.0
  %683 = vmatpush1.msra.mxu0 %v642
  %684 = vmatprep.subr.mxu0 0.0
  %685 = vmatpush1.msra.mxu0 %v641
  %686 = vmatprep.subr.mxu0 0.0
  %687 = vmatpush1.msra.mxu0 %v640
  %688 = vmatprep.subr.mxu0 0.0
  %689 = vmatpush2.msra.mxu0 0.0
  %690 = vmatprep.subr.mxu0 0.0
  %691 = vmatpush2.msra.mxu0 0.0
  %692 = vmatprep.subr.mxu0 0.0
  %693 = vmatpush2.msra.mxu0 0.0
  %694 = vmatprep.subr.mxu0 0.0
  %695 = vmatpush2.msra.mxu0 0.0
  %696 = vmatprep.subr.mxu0 0.0
  %697 = vmatpush2.msra.mxu0 0.0
  %698 = vmatprep.subr.mxu0 0.0
  %699 = vmatpush2.msra.mxu0 0.0
  %700 = vmatprep.subr.mxu0 0.0
  %701 = vmatpush2.msra.mxu0 0.0
  %702 = vmatprep.subr.mxu0 0.0
  %703 = vmatpush2.msra.mxu0 0.0
  %704 = vmatprep.subr.mxu0 0.0
  %705 = vmatpush2.msra.mxu0 0.0
  %706 = vmatprep.subr.mxu0 0.0
  %707 = vmatpush2.msra.mxu0 0.0
  %708 = vmatprep.subr.mxu0 0.0
  %709 = vmatpush2.msra.mxu0 0.0
  %710 = vmatprep.subr.mxu0 0.0
  %711 = vmatpush2.msra.mxu0 0.0
  %712 = vmatprep.subr.mxu0 0.0
  %713 = vmatpush2.msra.mxu0 0.0
  %714 = vmatprep.subr.mxu0 0.0
  %715 = vmatpush2.msra.mxu0 0.0
  %716 = vmatprep.subr.mxu0 0.0
  %717 = vmatpush2.msra.mxu0 0.0
  %718 = vmatprep.subr.mxu0 0.0
  %719 = vmatpush2.msra.mxu0 0.0
  %720 = vmatprep.mubr.f32.mxu0 0.0
  %721 = vmatmul.mubr.f32.gmra.mxu0 %v645
  %v722 = vpop.f32.mrf.mxu0
  %v723 = vadd.f32 0.0, %v722
  %v724 = vpop.f32.mrf.mxu0
  %725 = vmatprep.mubr.f32.mxu0 0.0
  %726 = vmatmul.mubr.f32.gmra.mxu0 %v648
  %v727 = vpop.f32.mrf.mxu0
  %v728 = vadd.f32 0.0, %v727
  %v729 = vpop.f32.mrf.mxu0
  %730 = vmatprep.mubr.f32.mxu0 0.0
  %731 = vmatmul.mubr.f32.gmra.mxu0 %v651
  %v732 = vpop.f32.mrf.mxu0
  %v733 = vadd.f32 0.0, %v732
  %v734 = vpop.f32.mrf.mxu0
  %735 = vmatprep.mubr.f32.mxu0 0.0
  %736 = vmatmul.mubr.f32.gmra.mxu0 %v654
  %v737 = vpop.f32.mrf.mxu0
  %v738 = vadd.f32 0.0, %v737
  %v739 = vpop.f32.mrf.mxu0
  %740 = vdwg.mxu0
  %745 = vrot.lane.b32.xlu0 %v723, 96
  %v746 = vpop.permute.xlu0 %745
  %747 = vrot.lane.b32.xlu0 %v728, 96
  %v748 = vpop.permute.xlu0 %747
  %749 = vrot.lane.b32.xlu0 %v733, 96
  %v750 = vpop.permute.xlu0 %749
  %751 = vrot.lane.b32.xlu0 %v738, 96
  %v752 = vpop.permute.xlu0 %751
  %757 = vrot.lane.b32.xlu0 %v723, 64
  %v758 = vpop.permute.xlu0 %757
  %759 = vrot.lane.b32.xlu0 %v728, 64
  %v760 = vpop.permute.xlu0 %759
  %761 = vrot.lane.b32.xlu0 %v733, 64
  %v762 = vpop.permute.xlu0 %761
  %763 = vrot.lane.b32.xlu0 %v738, 64
  %v764 = vpop.permute.xlu0 %763
  %v769 = vlaneseq
  %v770 = vshrl.u32 %v769, 7
  %v771 = vsub.s32 4, %v770
  %v772 = vrot.slane %v39, %v771
  %vm773 = vcmask 785408
  %v775 = vsel %vm773, %v635, 0
  %v778 = vsel %vm773, %v636, 0
  %v781 = vsel %vm773, %v637, 0
  %v784 = vsel %vm773, %v638, 0
  %786 = vmatprep.subr.mxu0 0.0
  %787 = vmatpush1.msra.mxu0 0.0
  %788 = vmatprep.subr.mxu0 0.0
  %789 = vmatpush1.msra.mxu0 0.0
  %790 = vmatprep.subr.mxu0 0.0
  %791 = vmatpush1.msra.mxu0 0.0
  %792 = vmatprep.subr.mxu0 0.0
  %793 = vmatpush1.msra.mxu0 0.0
  %794 = vmatprep.subr.mxu0 0.0
  %795 = vmatpush1.msra.mxu0 %v764
  %796 = vmatprep.subr.mxu0 0.0
  %797 = vmatpush1.msra.mxu0 %v762
  %798 = vmatprep.subr.mxu0 0.0
  %799 = vmatpush1.msra.mxu0 %v760
  %800 = vmatprep.subr.mxu0 0.0
  %801 = vmatpush1.msra.mxu0 %v758
  %802 = vmatprep.subr.mxu0 0.0
  %803 = vmatpush1.msra.mxu0 %v752
  %804 = vmatprep.subr.mxu0 0.0
  %805 = vmatpush1.msra.mxu0 %v750
  %806 = vmatprep.subr.mxu0 0.0
  %807 = vmatpush1.msra.mxu0 %v748
  %808 = vmatprep.subr.mxu0 0.0
  %809 = vmatpush1.msra.mxu0 %v746
  %810 = vmatprep.subr.mxu0 0.0
  %811 = vmatpush1.msra.mxu0 %v738
  %812 = vmatprep.subr.mxu0 0.0
  %813 = vmatpush1.msra.mxu0 %v733
  %814 = vmatprep.subr.mxu0 0.0
  %815 = vmatpush1.msra.mxu0 %v728
  %816 = vmatprep.subr.mxu0 0.0
  %817 = vmatpush1.msra.mxu0 %v723
  %818 = vmatprep.subr.mxu0 0.0
  %819 = vmatpush2.msra.mxu0 0.0
  %820 = vmatprep.subr.mxu0 0.0
  %821 = vmatpush2.msra.mxu0 0.0
  %822 = vmatprep.subr.mxu0 0.0
  %823 = vmatpush2.msra.mxu0 0.0
  %824 = vmatprep.subr.mxu0 0.0
  %825 = vmatpush2.msra.mxu0 0.0
  %826 = vmatprep.subr.mxu0 0.0
  %827 = vmatpush2.msra.mxu0 0.0
  %828 = vmatprep.subr.mxu0 0.0
  %829 = vmatpush2.msra.mxu0 0.0
  %830 = vmatprep.subr.mxu0 0.0
  %831 = vmatpush2.msra.mxu0 0.0
  %832 = vmatprep.subr.mxu0 0.0
  %833 = vmatpush2.msra.mxu0 0.0
  %834 = vmatprep.subr.mxu0 0.0
  %835 = vmatpush2.msra.mxu0 0.0
  %836 = vmatprep.subr.mxu0 0.0
  %837 = vmatpush2.msra.mxu0 0.0
  %838 = vmatprep.subr.mxu0 0.0
  %839 = vmatpush2.msra.mxu0 0.0
  %840 = vmatprep.subr.mxu0 0.0
  %841 = vmatpush2.msra.mxu0 0.0
  %842 = vmatprep.subr.mxu0 0.0
  %843 = vmatpush2.msra.mxu0 0.0
  %844 = vmatprep.subr.mxu0 0.0
  %845 = vmatpush2.msra.mxu0 0.0
  %846 = vmatprep.subr.mxu0 0.0
  %847 = vmatpush2.msra.mxu0 0.0
  %848 = vmatprep.subr.mxu0 0.0
  %849 = vmatpush2.msra.mxu0 0.0
  %850 = vmatprep.mubr.f32.mxu0 0.0
  %851 = vmatmul.mubr.f32.gmra.mxu0 %v775
  %v852 = vpop.f32.mrf.mxu0
  %v853 = vadd.f32 %v772, %v852
  %v854 = vpop.f32.mrf.mxu0
  %855 = vmatprep.mubr.f32.mxu0 0.0
  %856 = vmatmul.mubr.f32.gmra.mxu0 %v778
  %v857 = vpop.f32.mrf.mxu0
  %v858 = vadd.f32 %v772, %v857
  %v859 = vpop.f32.mrf.mxu0
  %860 = vmatprep.mubr.f32.mxu0 0.0
  %861 = vmatmul.mubr.f32.gmra.mxu0 %v781
  %v862 = vpop.f32.mrf.mxu0
  %v863 = vadd.f32 %v772, %v862
  %v864 = vpop.f32.mrf.mxu0
  %865 = vmatprep.mubr.f32.mxu0 0.0
  %866 = vmatmul.mubr.f32.gmra.mxu0 %v784
  %v867 = vpop.f32.mrf.mxu0
  %v868 = vadd.f32 %v772, %v867
  %v869 = vpop.f32.mrf.mxu0
  %870 = vdwg.mxu0
  %v871 = vmax.f32 %v853, 0.0
  %v872 = vmax.f32 %v858, 0.0
  %v873 = vmax.f32 %v863, 0.0
  %v874 = vmax.f32 %v868, 0.0
  %s875 = scalar_lea.vmem %s3, 64
  %v876 = vld [vmem:[%s875] sm:$0xff]
  %v877 = vld [vmem:[%s875 + $0x8] sm:$0xff]
  %v878 = vld [vmem:[%s875 + $0x10] sm:$0xff]
  %v879 = vld [vmem:[%s875 + $0x18] sm:$0xff]
  %v881 = vsel %vm301, %v871, 0
  %v884 = vsel %vm301, %v872, 0
  %v887 = vsel %vm301, %v873, 0
  %v890 = vsel %vm301, %v874, 0
  %892 = vmatprep.subr.mxu0 0.0
  %893 = vmatpush1.msra.mxu0 0.0
  %894 = vmatprep.subr.mxu0 0.0
  %895 = vmatpush1.msra.mxu0 0.0
  %896 = vmatprep.subr.mxu0 0.0
  %897 = vmatpush1.msra.mxu0 0.0
  %898 = vmatprep.subr.mxu0 0.0
  %899 = vmatpush1.msra.mxu0 0.0
  %900 = vmatprep.subr.mxu0 0.0
  %901 = vmatpush1.msra.mxu0 0.0
  %902 = vmatprep.subr.mxu0 0.0
  %903 = vmatpush1.msra.mxu0 0.0
  %904 = vmatprep.subr.mxu0 0.0
  %905 = vmatpush1.msra.mxu0 0.0
  %906 = vmatprep.subr.mxu0 0.0
  %907 = vmatpush1.msra.mxu0 0.0
  %908 = vmatprep.subr.mxu0 0.0
  %909 = vmatpush1.msra.mxu0 0.0
  %910 = vmatprep.subr.mxu0 0.0
  %911 = vmatpush1.msra.mxu0 0.0
  %912 = vmatprep.subr.mxu0 0.0
  %913 = vmatpush1.msra.mxu0 0.0
  %914 = vmatprep.subr.mxu0 0.0
  %915 = vmatpush1.msra.mxu0 0.0
  %916 = vmatprep.subr.mxu0 0.0
  %917 = vmatpush1.msra.mxu0 %v879
  %918 = vmatprep.subr.mxu0 0.0
  %919 = vmatpush1.msra.mxu0 %v878
  %920 = vmatprep.subr.mxu0 0.0
  %921 = vmatpush1.msra.mxu0 %v877
  %922 = vmatprep.subr.mxu0 0.0
  %923 = vmatpush1.msra.mxu0 %v876
  %924 = vmatprep.subr.mxu0 0.0
  %925 = vmatpush2.msra.mxu0 0.0
  %926 = vmatprep.subr.mxu0 0.0
  %927 = vmatpush2.msra.mxu0 0.0
  %928 = vmatprep.subr.mxu0 0.0
  %929 = vmatpush2.msra.mxu0 0.0
  %930 = vmatprep.subr.mxu0 0.0
  %931 = vmatpush2.msra.mxu0 0.0
  %932 = vmatprep.subr.mxu0 0.0
  %933 = vmatpush2.msra.mxu0 0.0
  %934 = vmatprep.subr.mxu0 0.0
  %935 = vmatpush2.msra.mxu0 0.0
  %936 = vmatprep.subr.mxu0 0.0
  %937 = vmatpush2.msra.mxu0 0.0
  %938 = vmatprep.subr.mxu0 0.0
  %939 = vmatpush2.msra.mxu0 0.0
  %940 = vmatprep.subr.mxu0 0.0
  %941 = vmatpush2.msra.mxu0 0.0
  %942 = vmatprep.subr.mxu0 0.0
  %943 = vmatpush2.msra.mxu0 0.0
  %944 = vmatprep.subr.mxu0 0.0
  %945 = vmatpush2.msra.mxu0 0.0
  %946 = vmatprep.subr.mxu0 0.0
  %947 = vmatpush2.msra.mxu0 0.0
  %948 = vmatprep.subr.mxu0 0.0
  %949 = vmatpush2.msra.mxu0 0.0
  %950 = vmatprep.subr.mxu0 0.0
  %951 = vmatpush2.msra.mxu0 0.0
  %952 = vmatprep.subr.mxu0 0.0
  %953 = vmatpush2.msra.mxu0 0.0
  %954 = vmatprep.subr.mxu0 0.0
  %955 = vmatpush2.msra.mxu0 0.0
  %956 = vmatprep.mubr.f32.mxu0 0.0
  %957 = vmatmul.mubr.f32.gmra.mxu0 %v881
  %v958 = vpop.f32.mrf.mxu0
  %v959 = vadd.f32 0.0, %v958
  %v960 = vpop.f32.mrf.mxu0
  %961 = vmatprep.mubr.f32.mxu0 0.0
  %962 = vmatmul.mubr.f32.gmra.mxu0 %v884
  %v963 = vpop.f32.mrf.mxu0
  %v964 = vadd.f32 0.0, %v963
  %v965 = vpop.f32.mrf.mxu0
  %966 = vmatprep.mubr.f32.mxu0 0.0
  %967 = vmatmul.mubr.f32.gmra.mxu0 %v887
  %v968 = vpop.f32.mrf.mxu0
  %v969 = vadd.f32 0.0, %v968
  %v970 = vpop.f32.mrf.mxu0
  %971 = vmatprep.mubr.f32.mxu0 0.0
  %972 = vmatmul.mubr.f32.gmra.mxu0 %v890
  %v973 = vpop.f32.mrf.mxu0
  %v974 = vadd.f32 0.0, %v973
  %v975 = vpop.f32.mrf.mxu0
  %976 = vdwg.mxu0
  %981 = vrot.lane.b32.xlu0 %v959, 96
  %v982 = vpop.permute.xlu0 %981
  %983 = vrot.lane.b32.xlu0 %v964, 96
  %v984 = vpop.permute.xlu0 %983
  %985 = vrot.lane.b32.xlu0 %v969, 96
  %v986 = vpop.permute.xlu0 %985
  %987 = vrot.lane.b32.xlu0 %v974, 96
  %v988 = vpop.permute.xlu0 %987
  %993 = vrot.lane.b32.xlu0 %v959, 64
  %v994 = vpop.permute.xlu0 %993
  %995 = vrot.lane.b32.xlu0 %v964, 64
  %v996 = vpop.permute.xlu0 %995
  %997 = vrot.lane.b32.xlu0 %v969, 64
  %v998 = vpop.permute.xlu0 %997
  %999 = vrot.lane.b32.xlu0 %v974, 64
  %v1000 = vpop.permute.xlu0 %999
  %v1005 = vlaneseq
  %v1006 = vshrl.u32 %v1005, 7
  %v1007 = vsub.s32 5, %v1006
  %v1008 = vrot.slane %v39, %v1007
  %1009 = vmatprep.subr.mxu0 0.0
  %1010 = vmatpush1.msra.mxu0 0.0
  %1011 = vmatprep.subr.mxu0 0.0
  %1012 = vmatpush1.msra.mxu0 0.0
  %1013 = vmatprep.subr.mxu0 0.0
  %1014 = vmatpush1.msra.mxu0 0.0
  %1015 = vmatprep.subr.mxu0 0.0
  %1016 = vmatpush1.msra.mxu0 0.0
  %1017 = vmatprep.subr.mxu0 0.0
  %1018 = vmatpush1.msra.mxu0 %v1000
  %1019 = vmatprep.subr.mxu0 0.0
  %1020 = vmatpush1.msra.mxu0 %v998
  %1021 = vmatprep.subr.mxu0 0.0
  %1022 = vmatpush1.msra.mxu0 %v996
  %1023 = vmatprep.subr.mxu0 0.0
  %1024 = vmatpush1.msra.mxu0 %v994
  %1025 = vmatprep.subr.mxu0 0.0
  %1026 = vmatpush1.msra.mxu0 %v988
  %1027 = vmatprep.subr.mxu0 0.0
  %1028 = vmatpush1.msra.mxu0 %v986
  %1029 = vmatprep.subr.mxu0 0.0
  %1030 = vmatpush1.msra.mxu0 %v984
  %1031 = vmatprep.subr.mxu0 0.0
  %1032 = vmatpush1.msra.mxu0 %v982
  %1033 = vmatprep.subr.mxu0 0.0
  %1034 = vmatpush1.msra.mxu0 %v974
  %1035 = vmatprep.subr.mxu0 0.0
  %1036 = vmatpush1.msra.mxu0 %v969
  %1037 = vmatprep.subr.mxu0 0.0
  %1038 = vmatpush1.msra.mxu0 %v964
  %1039 = vmatprep.subr.mxu0 0.0
  %1040 = vmatpush1.msra.mxu0 %v959
  %1041 = vmatprep.subr.mxu0 0.0
  %1042 = vmatpush2.msra.mxu0 0.0
  %1043 = vmatprep.subr.mxu0 0.0
  %1044 = vmatpush2.msra.mxu0 0.0
  %1045 = vmatprep.subr.mxu0 0.0
  %1046 = vmatpush2.msra.mxu0 0.0
  %1047 = vmatprep.subr.mxu0 0.0
  %1048 = vmatpush2.msra.mxu0 0.0
  %1049 = vmatprep.subr.mxu0 0.0
  %1050 = vmatpush2.msra.mxu0 0.0
  %1051 = vmatprep.subr.mxu0 0.0
  %1052 = vmatpush2.msra.mxu0 0.0
  %1053 = vmatprep.subr.mxu0 0.0
  %1054 = vmatpush2.msra.mxu0 0.0
  %1055 = vmatprep.subr.mxu0 0.0
  %1056 = vmatpush2.msra.mxu0 0.0
  %1057 = vmatprep.subr.mxu0 0.0
  %1058 = vmatpush2.msra.mxu0 0.0
  %1059 = vmatprep.subr.mxu0 0.0
  %1060 = vmatpush2.msra.mxu0 0.0
  %1061 = vmatprep.subr.mxu0 0.0
  %1062 = vmatpush2.msra.mxu0 0.0
  %1063 = vmatprep.subr.mxu0 0.0
  %1064 = vmatpush2.msra.mxu0 0.0
  %1065 = vmatprep.subr.mxu0 0.0
  %1066 = vmatpush2.msra.mxu0 0.0
  %1067 = vmatprep.subr.mxu0 0.0
  %1068 = vmatpush2.msra.mxu0 0.0
  %1069 = vmatprep.subr.mxu0 0.0
  %1070 = vmatpush2.msra.mxu0 0.0
  %1071 = vmatprep.subr.mxu0 0.0
  %1072 = vmatpush2.msra.mxu0 0.0
  %1073 = vmatprep.mubr.f32.mxu0 0.0
  %1074 = vmatmul.mubr.f32.gmra.mxu0 %v775
  %v1075 = vpop.f32.mrf.mxu0
  %v1076 = vadd.f32 %v1008, %v1075
  %v1077 = vpop.f32.mrf.mxu0
  %1078 = vmatprep.mubr.f32.mxu0 0.0
  %1079 = vmatmul.mubr.f32.gmra.mxu0 %v778
  %v1080 = vpop.f32.mrf.mxu0
  %v1081 = vadd.f32 %v1008, %v1080
  %v1082 = vpop.f32.mrf.mxu0
  %1083 = vmatprep.mubr.f32.mxu0 0.0
  %1084 = vmatmul.mubr.f32.gmra.mxu0 %v781
  %v1085 = vpop.f32.mrf.mxu0
  %v1086 = vadd.f32 %v1008, %v1085
  %v1087 = vpop.f32.mrf.mxu0
  %1088 = vmatprep.mubr.f32.mxu0 0.0
  %1089 = vmatmul.mubr.f32.gmra.mxu0 %v784
  %v1090 = vpop.f32.mrf.mxu0
  %v1091 = vadd.f32 %v1008, %v1090
  %v1092 = vpop.f32.mrf.mxu0
  %1093 = vdwg.mxu0
  %v1094 = vmax.f32 %v1076, 0.0
  %v1095 = vmax.f32 %v1081, 0.0
  %v1096 = vmax.f32 %v1086, 0.0
  %v1097 = vmax.f32 %v1091, 0.0
  %v1098 = vld [vmem:[%s4] sm:$0xff]
  %v1099 = vld [vmem:[%s4 + $0x8] sm:$0xff]
  %v1100 = vld [vmem:[%s4 + $0x10] sm:$0xff]
  %v1101 = vld [vmem:[%s4 + $0x18] sm:$0xff]
  %v1102 = vld [vmem:[%s4 + $0x20] sm:$0xff]
  %v1103 = vld [vmem:[%s4 + $0x28] sm:$0xff]
  %v1104 = vld [vmem:[%s4 + $0x30] sm:$0xff]
  %v1105 = vld [vmem:[%s4 + $0x38] sm:$0xff]
  %v1106 = vld [vmem:[%s4 + $0x40] sm:$0xff]
  %v1107 = vld [vmem:[%s4 + $0x48] sm:$0xff]
  %v1108 = vld [vmem:[%s4 + $0x50] sm:$0xff]
  %v1109 = vld [vmem:[%s4 + $0x58] sm:$0xff]
  %v1110 = vld [vmem:[%s4 + $0x60] sm:$0xff]
  %v1111 = vld [vmem:[%s4 + $0x68] sm:$0xff]
  %v1112 = vld [vmem:[%s4 + $0x70] sm:$0xff]
  %v1113 = vld [vmem:[%s4 + $0x78] sm:$0xff]
  %v1114 = vrot.slane %v39, 6
  %1115 = vrot.lane.b32.xlu0 %v1114, 126
  %v1116 = vpop.permute.xlu0 %1115
  %s1117 = vtos %v1116
  %v1118 = vstv %s1117
  %v1121 = vsel %vm301, %v1094, 0
  %v1124 = vsel %vm301, %v1095, 0
  %v1127 = vsel %vm301, %v1096, 0
  %v1130 = vsel %vm301, %v1097, 0
  %1132 = vmatprep.subr.mxu0 0.0
  %1133 = vmatpush1.msra.mxu0 0.0
  %1134 = vmatprep.subr.mxu0 0.0
  %1135 = vmatpush1.msra.mxu0 0.0
  %1136 = vmatprep.subr.mxu0 0.0
  %1137 = vmatpush1.msra.mxu0 0.0
  %1138 = vmatprep.subr.mxu0 0.0
  %1139 = vmatpush1.msra.mxu0 0.0
  %1140 = vmatprep.subr.mxu0 0.0
  %1141 = vmatpush1.msra.mxu0 0.0
  %1142 = vmatprep.subr.mxu0 0.0
  %1143 = vmatpush1.msra.mxu0 0.0
  %1144 = vmatprep.subr.mxu0 0.0
  %1145 = vmatpush1.msra.mxu0 0.0
  %1146 = vmatprep.subr.mxu0 0.0
  %1147 = vmatpush1.msra.mxu0 0.0
  %1148 = vmatprep.subr.mxu0 0.0
  %1149 = vmatpush1.msra.mxu0 0.0
  %1150 = vmatprep.subr.mxu0 0.0
  %1151 = vmatpush1.msra.mxu0 0.0
  %1152 = vmatprep.subr.mxu0 0.0
  %1153 = vmatpush1.msra.mxu0 0.0
  %1154 = vmatprep.subr.mxu0 0.0
  %1155 = vmatpush1.msra.mxu0 0.0
  %1156 = vmatprep.subr.mxu0 %v1111
  %1157 = vmatpush1.msra.mxu0 %v1110
  %1158 = vmatprep.subr.mxu0 %v1107
  %1159 = vmatpush1.msra.mxu0 %v1106
  %1160 = vmatprep.subr.mxu0 %v1103
  %1161 = vmatpush1.msra.mxu0 %v1102
  %1162 = vmatprep.subr.mxu0 %v1099
  %1163 = vmatpush1.msra.mxu0 %v1098
  %1164 = vmatprep.subr.mxu0 0.0
  %1165 = vmatpush2.msra.mxu0 0.0
  %1166 = vmatprep.subr.mxu0 0.0
  %1167 = vmatpush2.msra.mxu0 0.0
  %1168 = vmatprep.subr.mxu0 0.0
  %1169 = vmatpush2.msra.mxu0 0.0
  %1170 = vmatprep.subr.mxu0 0.0
  %1171 = vmatpush2.msra.mxu0 0.0
  %1172 = vmatprep.subr.mxu0 0.0
  %1173 = vmatpush2.msra.mxu0 0.0
  %1174 = vmatprep.subr.mxu0 0.0
  %1175 = vmatpush2.msra.mxu0 0.0
  %1176 = vmatprep.subr.mxu0 0.0
  %1177 = vmatpush2.msra.mxu0 0.0
  %1178 = vmatprep.subr.mxu0 0.0
  %1179 = vmatpush2.msra.mxu0 0.0
  %1180 = vmatprep.subr.mxu0 0.0
  %1181 = vmatpush2.msra.mxu0 0.0
  %1182 = vmatprep.subr.mxu0 0.0
  %1183 = vmatpush2.msra.mxu0 0.0
  %1184 = vmatprep.subr.mxu0 0.0
  %1185 = vmatpush2.msra.mxu0 0.0
  %1186 = vmatprep.subr.mxu0 0.0
  %1187 = vmatpush2.msra.mxu0 0.0
  %1188 = vmatprep.subr.mxu0 0.0
  %1189 = vmatpush2.msra.mxu0 0.0
  %1190 = vmatprep.subr.mxu0 0.0
  %1191 = vmatpush2.msra.mxu0 0.0
  %1192 = vmatprep.subr.mxu0 0.0
  %1193 = vmatpush2.msra.mxu0 0.0
  %1194 = vmatprep.subr.mxu0 0.0
  %1195 = vmatpush2.msra.mxu0 0.0
  %1196 = vmatprep.mubr.f32.mxu0 0.0
  %1197 = vmatmul.mubr.f32.gmra.mxu0 %v1121
  %v1198 = vpop.f32.mrf.mxu0
  %v1199 = vadd.f32 %v1118, %v1198
  %v1200 = vpop.f32.mrf.mxu0
  %v1201 = vadd.f32 %v1118, %v1200
  %1202 = vmatprep.mubr.f32.mxu0 0.0
  %1203 = vmatmul.mubr.f32.gmra.mxu0 %v1124
  %v1204 = vpop.f32.mrf.mxu0
  %v1205 = vadd.f32 %v1118, %v1204
  %v1206 = vpop.f32.mrf.mxu0
  %v1207 = vadd.f32 %v1118, %v1206
  %1208 = vmatprep.mubr.f32.mxu0 0.0
  %1209 = vmatmul.mubr.f32.gmra.mxu0 %v1127
  %v1210 = vpop.f32.mrf.mxu0
  %v1211 = vadd.f32 %v1118, %v1210
  %v1212 = vpop.f32.mrf.mxu0
  %v1213 = vadd.f32 %v1118, %v1212
  %1214 = vmatprep.mubr.f32.mxu0 0.0
  %1215 = vmatmul.mubr.f32.gmra.mxu0 %v1130
  %v1216 = vpop.f32.mrf.mxu0
  %v1217 = vadd.f32 %v1118, %v1216
  %v1218 = vpop.f32.mrf.mxu0
  %v1219 = vadd.f32 %v1118, %v1218
  %1220 = vdwg.mxu0
  %1221 = vmatprep.subr.mxu0 0.0
  %1222 = vmatpush1.msra.mxu0 0.0
  %1223 = vmatprep.subr.mxu0 0.0
  %1224 = vmatpush1.msra.mxu0 0.0
  %1225 = vmatprep.subr.mxu0 0.0
  %1226 = vmatpush1.msra.mxu0 0.0
  %1227 = vmatprep.subr.mxu0 0.0
  %1228 = vmatpush1.msra.mxu0 0.0
  %1229 = vmatprep.subr.mxu0 0.0
  %1230 = vmatpush1.msra.mxu0 0.0
  %1231 = vmatprep.subr.mxu0 0.0
  %1232 = vmatpush1.msra.mxu0 0.0
  %1233 = vmatprep.subr.mxu0 0.0
  %1234 = vmatpush1.msra.mxu0 0.0
  %1235 = vmatprep.subr.mxu0 0.0
  %1236 = vmatpush1.msra.mxu0 0.0
  %1237 = vmatprep.subr.mxu0 0.0
  %1238 = vmatpush1.msra.mxu0 0.0
  %1239 = vmatprep.subr.mxu0 0.0
  %1240 = vmatpush1.msra.mxu0 0.0
  %1241 = vmatprep.subr.mxu0 0.0
  %1242 = vmatpush1.msra.mxu0 0.0
  %1243 = vmatprep.subr.mxu0 0.0
  %1244 = vmatpush1.msra.mxu0 0.0
  %1245 = vmatprep.subr.mxu0 %v1113
  %1246 = vmatpush1.msra.mxu0 %v1112
  %1247 = vmatprep.subr.mxu0 %v1109
  %1248 = vmatpush1.msra.mxu0 %v1108
  %1249 = vmatprep.subr.mxu0 %v1105
  %1250 = vmatpush1.msra.mxu0 %v1104
  %1251 = vmatprep.subr.mxu0 %v1101
  %1252 = vmatpush1.msra.mxu0 %v1100
  %1253 = vmatprep.subr.mxu0 0.0
  %1254 = vmatpush2.msra.mxu0 0.0
  %1255 = vmatprep.subr.mxu0 0.0
  %1256 = vmatpush2.msra.mxu0 0.0
  %1257 = vmatprep.subr.mxu0 0.0
  %1258 = vmatpush2.msra.mxu0 0.0
  %1259 = vmatprep.subr.mxu0 0.0
  %1260 = vmatpush2.msra.mxu0 0.0
  %1261 = vmatprep.subr.mxu0 0.0
  %1262 = vmatpush2.msra.mxu0 0.0
  %1263 = vmatprep.subr.mxu0 0.0
  %1264 = vmatpush2.msra.mxu0 0.0
  %1265 = vmatprep.subr.mxu0 0.0
  %1266 = vmatpush2.msra.mxu0 0.0
  %1267 = vmatprep.subr.mxu0 0.0
  %1268 = vmatpush2.msra.mxu0 0.0
  %1269 = vmatprep.subr.mxu0 0.0
  %1270 = vmatpush2.msra.mxu0 0.0
  %1271 = vmatprep.subr.mxu0 0.0
  %1272 = vmatpush2.msra.mxu0 0.0
  %1273 = vmatprep.subr.mxu0 0.0
  %1274 = vmatpush2.msra.mxu0 0.0
  %1275 = vmatprep.subr.mxu0 0.0
  %1276 = vmatpush2.msra.mxu0 0.0
  %1277 = vmatprep.subr.mxu0 0.0
  %1278 = vmatpush2.msra.mxu0 0.0
  %1279 = vmatprep.subr.mxu0 0.0
  %1280 = vmatpush2.msra.mxu0 0.0
  %1281 = vmatprep.subr.mxu0 0.0
  %1282 = vmatpush2.msra.mxu0 0.0
  %1283 = vmatprep.subr.mxu0 0.0
  %1284 = vmatpush2.msra.mxu0 0.0
  %1285 = vmatprep.mubr.f32.mxu0 0.0
  %1286 = vmatmul.mubr.f32.gmra.mxu0 %v1121
  %v1287 = vpop.f32.mrf.mxu0
  %v1288 = vadd.f32 %v1118, %v1287
  %v1289 = vpop.f32.mrf.mxu0
  %v1290 = vadd.f32 %v1118, %v1289
  %1291 = vmatprep.mubr.f32.mxu0 0.0
  %1292 = vmatmul.mubr.f32.gmra.mxu0 %v1124
  %v1293 = vpop.f32.mrf.mxu0
  %v1294 = vadd.f32 %v1118, %v1293
  %v1295 = vpop.f32.mrf.mxu0
  %v1296 = vadd.f32 %v1118, %v1295
  %1297 = vmatprep.mubr.f32.mxu0 0.0
  %1298 = vmatmul.mubr.f32.gmra.mxu0 %v1127
  %v1299 = vpop.f32.mrf.mxu0
  %v1300 = vadd.f32 %v1118, %v1299
  %v1301 = vpop.f32.mrf.mxu0
  %v1302 = vadd.f32 %v1118, %v1301
  %1303 = vmatprep.mubr.f32.mxu0 0.0
  %1304 = vmatmul.mubr.f32.gmra.mxu0 %v1130
  %v1305 = vpop.f32.mrf.mxu0
  %v1306 = vadd.f32 %v1118, %v1305
  %v1307 = vpop.f32.mrf.mxu0
  %v1308 = vadd.f32 %v1118, %v1307
  %1309 = vdwg.mxu0
  %v1310 = vmul.f32 %v512, %v1199
  %v1311 = vmul.f32 %v514, %v1201
  %v1312 = vmul.f32 %v601, %v1288
  %v1313 = vmul.f32 %v603, %v1290
  %v1314 = vmul.f32 %v518, %v1205
  %v1315 = vmul.f32 %v520, %v1207
  %v1316 = vmul.f32 %v607, %v1294
  %v1317 = vmul.f32 %v609, %v1296
  %v1318 = vmul.f32 %v524, %v1211
  %v1319 = vmul.f32 %v526, %v1213
  %v1320 = vmul.f32 %v613, %v1300
  %v1321 = vmul.f32 %v615, %v1302
  %v1322 = vmul.f32 %v530, %v1217
  %v1323 = vmul.f32 %v532, %v1219
  %v1324 = vmul.f32 %v619, %v1306
  %v1325 = vmul.f32 %v621, %v1308
  %v1326 = vmul.f32 %v1310, 0.5
  %v1327 = vmul.f32 %v1311, 0.5
  %v1328 = vmul.f32 %v1312, 0.5
  %v1329 = vmul.f32 %v1313, 0.5
  %v1330 = vmul.f32 %v1314, 0.5
  %v1331 = vmul.f32 %v1315, 0.5
  %v1332 = vmul.f32 %v1316, 0.5
  %v1333 = vmul.f32 %v1317, 0.5
  %v1334 = vmul.f32 %v1318, 0.5
  %v1335 = vmul.f32 %v1319, 0.5
  %v1336 = vmul.f32 %v1320, 0.5
  %v1337 = vmul.f32 %v1321, 0.5
  %v1338 = vmul.f32 %v1322, 0.5
  %v1339 = vmul.f32 %v1323, 0.5
  %v1340 = vmul.f32 %v1324, 0.5
  %v1341 = vmul.f32 %v1325, 0.5
  %v1342 = vtanh.pop %v1326
  %v1343 = vtanh.pop %v1327
  %v1344 = vtanh.pop %v1328
  %v1345 = vtanh.pop %v1329
  %v1346 = vtanh.pop %v1330
  %v1347 = vtanh.pop %v1331
  %v1348 = vtanh.pop %v1332
  %v1349 = vtanh.pop %v1333
  %v1350 = vtanh.pop %v1334
  %v1351 = vtanh.pop %v1335
  %v1352 = vtanh.pop %v1336
  %v1353 = vtanh.pop %v1337
  %v1354 = vtanh.pop %v1338
  %v1355 = vtanh.pop %v1339
  %v1356 = vtanh.pop %v1340
  %v1357 = vtanh.pop %v1341
  %v1358 = vmul.f32 %v1342, 0.5
  %v1359 = vmul.f32 %v1343, 0.5
  %v1360 = vmul.f32 %v1344, 0.5
  %v1361 = vmul.f32 %v1345, 0.5
  %v1362 = vmul.f32 %v1346, 0.5
  %v1363 = vmul.f32 %v1347, 0.5
  %v1364 = vmul.f32 %v1348, 0.5
  %v1365 = vmul.f32 %v1349, 0.5
  %v1366 = vmul.f32 %v1350, 0.5
  %v1367 = vmul.f32 %v1351, 0.5
  %v1368 = vmul.f32 %v1352, 0.5
  %v1369 = vmul.f32 %v1353, 0.5
  %v1370 = vmul.f32 %v1354, 0.5
  %v1371 = vmul.f32 %v1355, 0.5
  %v1372 = vmul.f32 %v1356, 0.5
  %v1373 = vmul.f32 %v1357, 0.5
  %v1374 = vadd.f32 %v1358, 1.5
  %v1375 = vadd.f32 %v1359, 1.5
  %v1376 = vadd.f32 %v1360, 1.5
  %v1377 = vadd.f32 %v1361, 1.5
  %v1378 = vadd.f32 %v1362, 1.5
  %v1379 = vadd.f32 %v1363, 1.5
  %v1380 = vadd.f32 %v1364, 1.5
  %v1381 = vadd.f32 %v1365, 1.5
  %v1382 = vadd.f32 %v1366, 1.5
  %v1383 = vadd.f32 %v1367, 1.5
  %v1384 = vadd.f32 %v1368, 1.5
  %v1385 = vadd.f32 %v1369, 1.5
  %v1386 = vadd.f32 %v1370, 1.5
  %v1387 = vadd.f32 %v1371, 1.5
  %v1388 = vadd.f32 %v1372, 1.5
  %v1389 = vadd.f32 %v1373, 1.5
  %v1390 = vmul.f32 %v1374, %v23
  %v1391 = vmul.f32 %v1375, %v24
  %v1392 = vmul.f32 %v1376, %v25
  %v1393 = vmul.f32 %v1377, %v26
  %v1394 = vmul.f32 %v1378, %v27
  %v1395 = vmul.f32 %v1379, %v28
  %v1396 = vmul.f32 %v1380, %v29
  %v1397 = vmul.f32 %v1381, %v30
  %v1398 = vmul.f32 %v1382, %v31
  %v1399 = vmul.f32 %v1383, %v32
  %v1400 = vmul.f32 %v1384, %v33
  %v1401 = vmul.f32 %v1385, %v34
  %v1402 = vmul.f32 %v1386, %v35
  %v1403 = vmul.f32 %v1387, %v36
  %v1404 = vmul.f32 %v1388, %v37
  %v1405 = vmul.f32 %v1389, %v38
  %1406 = vst [vmem:[%s6] sm:$0xff] %v1390
  %1407 = vst [vmem:[%s6 + $0x8] sm:$0xff] %v1391
  %1408 = vst [vmem:[%s6 + $0x10] sm:$0xff] %v1392
  %1409 = vst [vmem:[%s6 + $0x18] sm:$0xff] %v1393
  %1410 = vst [vmem:[%s6 + $0x20] sm:$0xff] %v1394
  %1411 = vst [vmem:[%s6 + $0x28] sm:$0xff] %v1395
  %1412 = vst [vmem:[%s6 + $0x30] sm:$0xff] %v1396
  %1413 = vst [vmem:[%s6 + $0x38] sm:$0xff] %v1397
  %1414 = vst [vmem:[%s6 + $0x40] sm:$0xff] %v1398
  %1415 = vst [vmem:[%s6 + $0x48] sm:$0xff] %v1399
  %1416 = vst [vmem:[%s6 + $0x50] sm:$0xff] %v1400
  %1417 = vst [vmem:[%s6 + $0x58] sm:$0xff] %v1401
  %1418 = vst [vmem:[%s6 + $0x60] sm:$0xff] %v1402
  %1419 = vst [vmem:[%s6 + $0x68] sm:$0xff] %v1403
  %1420 = vst [vmem:[%s6 + $0x70] sm:$0xff] %v1404
  %1421 = vst [vmem:[%s6 + $0x78] sm:$0xff] %v1405
  // Predicated region
  $region26: #{bam_pallas.1} parent=0 // pred_check
    _
  $region27: #{bam_pallas.1} parent=0 // pred_check_branch
    %1423 = sbr.rel (0) target = $region29
  $region28: #{bam_pallas.1} parent=0 // pred_region
    _
  $region29: #{bam_pallas.1} parent=0 // pred_fallthru
    _
  // Predicated region
  $region30: #{bam_pallas.1} parent=0 // pred_check
    _
  $region31: #{bam_pallas.1} parent=0 // pred_check_branch
    %1425 = sbr.rel (0) target = $region33
  $region32: #{bam_pallas.1} parent=0 // pred_region
    _
  $region33: #{bam_pallas.1} parent=0 // pred_fallthru
    _

</llo_original>
